<compile_context>
chip_gen: v7x
topology: tpu7x:2x2x1
jax: 0.10.0
libtpu: 0.0.40
codegen_flags: <defaults>
</compile_context>

<pallas_src>
import jax
import jax.numpy as jnp
from jax.experimental import pallas as pl
from jax.experimental.pallas import tpu as pltpu

EPS = 1e-5
LANE = 128
VMEM_LIMIT = 64 * 1024 * 1024


def _round_up(x, m):
    return (x + m - 1) // m * m


# --------------------------------------------------------------------------
# Pass 1: conv (9 shifted matmuls) + per-channel sum / sum-of-squares
# --------------------------------------------------------------------------
def _conv_stats_kernel(x_ref, w_ref, y_ref, sum_ref, sq_ref):
    # x_ref:   (TR, 3, W+2, Cin)  bf16  row tile + vertical taps (dy = 0,1,2)
    # w_ref:   (9, Cin, Coutp)    bf16  resident across the grid
    # y_ref:   (TR*W, Coutp)      bf16  conv output tile (pre-BN), staged to HBM
    # sum_ref: (1, Coutp)         f32   resident accumulator (per-channel sum)
    # sq_ref:  (1, Coutp)         f32   resident accumulator (per-channel sumsq)
    @pl.when(pl.program_id(0) == 0)
    def _init():
        sum_ref[...] = jnp.zeros_like(sum_ref)
        sq_ref[...] = jnp.zeros_like(sq_ref)

    tr, _, wp, cin = x_ref.shape
    w_out = wp - 2
    coutp = y_ref.shape[-1]

    x = x_ref[...]                                     # single tile load
    acc = jnp.zeros((tr * w_out, coutp), jnp.float32)  # f32 accumulator
    for dy in range(3):
        for dx in range(3):
            patch = x[:, dy, dx:dx + w_out, :].reshape(tr * w_out, cin)
            acc = acc + jnp.dot(patch, w_ref[dy * 3 + dx],
                                preferred_element_type=jnp.float32)

    y_ref[...] = acc.astype(y_ref.dtype)
    sum_ref[...] += jnp.sum(acc, axis=0, keepdims=True)
    sq_ref[...] += jnp.sum(acc * acc, axis=0, keepdims=True)


def _conv_stats(x_rows, w_taps, tile_rows, w_out):
    n_rows, _, wp, cin = x_rows.shape
    coutp = w_taps.shape[-1]
    grid = n_rows // tile_rows
    m = n_rows * w_out
    tm = tile_rows * w_out
    cost = pl.CostEstimate(
        flops=2 * m * (9 * cin) * coutp,
        transcendentals=0,
        bytes_accessed=(x_rows.size * x_rows.dtype.itemsize
                        + w_taps.size * w_taps.dtype.itemsize
                        + m * coutp * 2 + 2 * coutp * 4))
    return pl.pallas_call(
        _conv_stats_kernel,
        out_shape=(jax.ShapeDtypeStruct((m, coutp), jnp.bfloat16),
                   jax.ShapeDtypeStruct((1, coutp), jnp.float32),
                   jax.ShapeDtypeStruct((1, coutp), jnp.float32)),
        grid_spec=pltpu.PrefetchScalarGridSpec(
            num_scalar_prefetch=0,
            grid=(grid,),
            in_specs=[
                pl.BlockSpec((tile_rows, 3, wp, cin), lambda i: (i, 0, 0, 0)),
                pl.BlockSpec(w_taps.shape, lambda i: (0, 0, 0)),   # resident
            ],
            out_specs=[
                pl.BlockSpec((tm, coutp), lambda i: (i, 0)),
                pl.BlockSpec((1, coutp), lambda i: (0, 0)),        # accumulator
                pl.BlockSpec((1, coutp), lambda i: (0, 0)),        # accumulator
            ],
        ),
        compiler_params=pltpu.CompilerParams(
            dimension_semantics=("arbitrary",),   # resident stats accumulator
            vmem_limit_bytes=VMEM_LIMIT),
        cost_estimate=cost,
    )(x_rows, w_taps)


# --------------------------------------------------------------------------
# Pass 2: y * scale + shift, ReLU  (BN folded to one FMA per element)
# --------------------------------------------------------------------------
def _bn_relu_kernel(y_ref, scale_ref, shift_ref, o_ref):
    y = y_ref[...].astype(jnp.float32)
    o_ref[...] = jnp.maximum(y * scale_ref[...] + shift_ref[...],
                             0.0).astype(o_ref.dtype)


def _bn_relu(y, scale, shift, tile_m, out_dtype):
    m, coutp = y.shape
    grid = m // tile_m
    cost = pl.CostEstimate(
        flops=3 * m * coutp,
        transcendentals=0,
        bytes_accessed=(y.size * y.dtype.itemsize
                        + m * coutp * jnp.dtype(out_dtype).itemsize
                        + 2 * coutp * 4))
    return pl.pallas_call(
        _bn_relu_kernel,
        out_shape=jax.ShapeDtypeStruct((m, coutp), out_dtype),
        grid_spec=pltpu.PrefetchScalarGridSpec(
            num_scalar_prefetch=0,
            grid=(grid,),
            in_specs=[
                pl.BlockSpec((tile_m, coutp), lambda i: (i, 0)),
                pl.BlockSpec((1, coutp), lambda i: (0, 0)),        # resident
                pl.BlockSpec((1, coutp), lambda i: (0, 0)),        # resident
            ],
            out_specs=pl.BlockSpec((tile_m, coutp), lambda i: (i, 0)),
        ),
        compiler_params=pltpu.CompilerParams(
            dimension_semantics=("parallel",),
            vmem_limit_bytes=VMEM_LIMIT),
        cost_estimate=cost,
    )(y, scale, shift)


# --------------------------------------------------------------------------
# JAX glue
# --------------------------------------------------------------------------
def _row_triples(x_nhwc):
    # (N, H, W, C) -> (N*H, 3, W+2, C): row r carries padded rows r-1, r, r+1.
    n, h, w, c = x_nhwc.shape
    xp = jnp.pad(x_nhwc, ((0, 0), (1, 1), (1, 1), (0, 0)))
    rows = jnp.stack([xp[:, dy:dy + h, :, :] for dy in range(3)], axis=2)
    return rows.reshape(n * h, 3, w + 2, c)


def _stage(x_nhwc, w_oihw, gamma, beta, coutp, tile_rows, out_dtype):
    n, h, w, cin = x_nhwc.shape
    cout, w_in = w_oihw.shape[0], w_oihw.shape[1]

    # OIHW -> (9, Cin, Coutp) bf16, zero-padded in/out channels.
    w_taps = jnp.transpose(w_oihw, (2, 3, 1, 0)).reshape(9, w_in, cout)
    w_taps = jnp.pad(w_taps, ((0, 0), (0, cin - w_in), (0, coutp - cout)))
    w_taps = w_taps.astype(jnp.bfloat16)

    x_rows = _row_triples(x_nhwc)                        # (N*H, 3, W+2, Cin)
    y, s, ss = _conv_stats(x_rows, w_taps, tile_rows, w)

    # Exact training-mode BN statistics over all M rows, folded to scale/shift.
    m = n * h * w
    mean = s / m
    var = ss / m - mean * mean                           # biased variance
    inv = jax.lax.rsqrt(var + EPS)
    g = jnp.pad(gamma.astype(jnp.float32), (0, coutp - cout)).reshape(1, coutp)
    b = jnp.pad(beta.astype(jnp.float32), (0, coutp - cout)).reshape(1, coutp)
    scale = g * inv
    shift = b - mean * scale

    out = _bn_relu(y, scale, shift, tile_rows * w, out_dtype)
    return out.reshape(n, h, w, coutp)


def double_conv(x_nchw, w1, g1, b1, w2, g2, b2, *, row_tile=None):
    """x_nchw: (N, Cin, H, W); w*: (Cout, Cin_stage, 3, 3) PyTorch OIHW layout."""
    n, cin, h, w = x_nchw.shape
    cout = w1.shape[0]
    coutp = _round_up(cout, LANE)      # lane-dense output channels
    cinp = _round_up(cin, 8)           # sublane-friendly input channels

    n_rows = n * h
    if row_tile is None:
        row_tile = max(1, min(n_rows, 2048 // max(w, 1)))
    while n_rows % row_tile:
        row_tile -= 1

    x = jnp.transpose(x_nchw, (0, 2, 3, 1)).astype(jnp.bfloat16)   # NHWC bf16
    if cinp != cin:
        x = jnp.pad(x, ((0, 0), (0, 0), (0, 0), (0, cinp - cin)))

    # Stage 1 stays in bf16 (feeds stage 2); stage 2 finishes in f32.
    y1 = _stage(x, w1, g1, b1, coutp, row_tile, jnp.bfloat16)
    y2 = _stage(y1, w2, g2, b2, coutp, row_tile, jnp.float32)

    y2 = y2[..., :cout]
    return jnp.transpose(y2, (0, 3, 1, 2))               # back to NCHW


# --------------------------------------------------------------------------
# Reference (f32 XLA) and test
# --------------------------------------------------------------------------
def _reference_double_conv(x, w1, g1, b1, w2, g2, b2):
    def conv(x, w):
        return jax.lax.conv_general_dilated(
            x, w, window_strides=(1, 1), padding=((1, 1), (1, 1)),
            dimension_numbers=('NCHW', 'OIHW', 'NCHW'))

    def bn_relu(y, g, b):
        mean = y.mean(axis=(0, 2, 3), keepdims=True)
        var = ((y - mean) ** 2).mean(axis=(0, 2, 3), keepdims=True)
        yn = (y - mean) * jax.lax.rsqrt(var + EPS)
        return jnp.maximum(yn * g.reshape(1, -1, 1, 1) + b.reshape(1, -1, 1, 1), 0.0)

    y = bn_relu(conv(x, w1), g1, b1)
    return bn_relu(conv(y, w2), g2, b2)


if __name__ == "__main__":
    N, Cin, Cout, H, W = 2, 4, 8, 16, 16

    key = jax.random.PRNGKey(0)
    kx, k1, k2 = jax.random.split(key, 3)

    x = jax.random.normal(kx, (N, Cin, H, W), dtype=jnp.float32)

    bound1 = 1.0 / (Cin * 9) ** 0.5
    bound2 = 1.0 / (Cout * 9) ** 0.5
    w1 = jax.random.uniform(k1, (Cout, Cin, 3, 3), jnp.float32, -bound1, bound1)
    w2 = jax.random.uniform(k2, (Cout, Cout, 3, 3), jnp.float32, -bound2, bound2)

    g1 = jnp.ones((Cout,), jnp.float32)
    b1 = jnp.zeros((Cout,), jnp.float32)
    g2 = jnp.ones((Cout,), jnp.float32)
    b2 = jnp.zeros((Cout,), jnp.float32)

    # row_tile=8 -> a 4-step grid, exercising the cross-tile BN accumulator.
    out = double_conv(x, w1, g1, b1, w2, g2, b2, row_tile=8)
    out = jax.block_until_ready(out)

    ref = _reference_double_conv(x, w1, g1, b1, w2, g2, b2)
    ref = jax.block_until_ready(ref)

    assert out.shape == (N, Cout, H, W), out.shape
    max_err = float(jnp.max(jnp.abs(out - ref)))
    # bf16 activations/weights on the MXU (f32 accumulation) -> looser tolerance
    assert jnp.allclose(out, ref, atol=5e-2, rtol=5e-2), max_err

    print("KERNEL_OK")
</pallas_src>

<mosaic_0001>
module attributes {stable_mosaic.version = 11 : i64} {
  func.func @_conv_stats_kernel(%arg0: i32, %arg1: memref<8x3x18x8xbf16, #tpu.memory_space<vmem>>, %arg2: memref<9x8x128xbf16, #tpu.memory_space<vmem>>, %arg3: memref<128x128xbf16, #tpu.memory_space<vmem>>, %arg4: memref<1x128xf32, #tpu.memory_space<vmem>>, %arg5: memref<1x128xf32, #tpu.memory_space<vmem>>) attributes {dimension_semantics = [#tpu.dimension_semantics<arbitrary>], iteration_bounds = array<i64: 4>, scalar_prefetch = 0 : i64, scratch_operands = 0 : i64, tpu.core_type = #tpu.core_type<tc>, window_params = [{transform_indices = @transform_0, window_bounds = array<i64: 8, 3, 18, 8>}, {pipeline_mode = #tpu.pipeline_mode<synchronous>, transform_indices = @transform_1, window_bounds = array<i64: 9, 8, 128>}, {transform_indices = @transform_2, window_bounds = array<i64: 128, 128>}, {pipeline_mode = #tpu.pipeline_mode<synchronous>, transform_indices = @transform_3, window_bounds = array<i64: 1, 128>}, {pipeline_mode = #tpu.pipeline_mode<synchronous>, transform_indices = @transform_4, window_bounds = array<i64: 1, 128>}]} {
    %c0_i32 = arith.constant 0 : i32
    %0 = arith.cmpi eq, %arg0, %c0_i32 : i32
    %1 = arith.extui %0 : i1 to i32
    %c0_i32_0 = arith.constant 0 : i32
    %2 = arith.cmpi ne, %1, %c0_i32_0 : i32
    scf.if %2 {
      %cst_44 = arith.constant 0.000000e+00 : f32
      %81 = vector.broadcast %cst_44 : f32 to vector<1x128xf32>
      %c0_45 = arith.constant 0 : index
      %c0_46 = arith.constant 0 : index
      %82 = vector.load %arg4[%c0_45, %c0_46] : memref<1x128xf32, #tpu.memory_space<vmem>>, vector<1x128xf32>
      tpu.vector_store %arg4[%c0_45, %c0_46], %81 {strides = array<i32>} : memref<1x128xf32, #tpu.memory_space<vmem>>, vector<1x128xf32>,
      %cst_47 = arith.constant 0.000000e+00 : f32
      %83 = vector.broadcast %cst_47 : f32 to vector<1x128xf32>
      %c0_48 = arith.constant 0 : index
      %c0_49 = arith.constant 0 : index
      %84 = vector.load %arg5[%c0_48, %c0_49] : memref<1x128xf32, #tpu.memory_space<vmem>>, vector<1x128xf32>
      tpu.vector_store %arg5[%c0_48, %c0_49], %83 {strides = array<i32>} : memref<1x128xf32, #tpu.memory_space<vmem>>, vector<1x128xf32>,
    } else {
    }
    %c0 = arith.constant 0 : index
    %c0_1 = arith.constant 0 : index
    %c0_2 = arith.constant 0 : index
    %c0_3 = arith.constant 0 : index
    %3 = vector.load %arg1[%c0, %c0_1, %c0_2, %c0_3] : memref<8x3x18x8xbf16, #tpu.memory_space<vmem>>, vector<8x3x18x8xbf16>
    %cst = arith.constant 0.000000e+00 : f32
    %4 = vector.broadcast %cst : f32 to vector<128x128xf32>
    %5 = vector.extract_strided_slice %3 {offsets = [0, 0, 0, 0], sizes = [8, 1, 16, 8], strides = [1, 1, 1, 1]} : vector<8x3x18x8xbf16> to vector<8x1x16x8xbf16>
    %6 = vector.shape_cast %5 : vector<8x1x16x8xbf16> to vector<8x16x8xbf16>
    %7 = vector.shape_cast %6 : vector<8x16x8xbf16> to vector<128x8xbf16>
    %c0_4 = arith.constant 0 : index
    %c0_5 = arith.constant 0 : index
    %c0_6 = arith.constant 0 : index
    %8 = vector.load %arg2[%c0_4, %c0_5, %c0_6] : memref<9x8x128xbf16, #tpu.memory_space<vmem>>, vector<1x8x128xbf16>
    %9 = vector.shape_cast %8 : vector<1x8x128xbf16> to vector<8x128xbf16>
    %cst_7 = arith.constant dense<0.000000e+00> : vector<128x128xf32>
    %10 = tpu.matmul %7, %9, %cst_7 {dimension_numbers = #tpu.dot_dimension_numbers<[1], [0], [0], [1], [0, 0, 1, 1], [], []>} : vector<128x8xbf16>, vector<8x128xbf16>, vector<128x128xf32> -> vector<128x128xf32>
    %11 = arith.addf %4, %10 : vector<128x128xf32>
    %12 = vector.extract_strided_slice %3 {offsets = [0, 0, 1, 0], sizes = [8, 1, 16, 8], strides = [1, 1, 1, 1]} : vector<8x3x18x8xbf16> to vector<8x1x16x8xbf16>
    %13 = vector.shape_cast %12 : vector<8x1x16x8xbf16> to vector<8x16x8xbf16>
    %14 = vector.shape_cast %13 : vector<8x16x8xbf16> to vector<128x8xbf16>
    %c1 = arith.constant 1 : index
    %c0_8 = arith.constant 0 : index
    %c0_9 = arith.constant 0 : index
    %15 = vector.load %arg2[%c1, %c0_8, %c0_9] : memref<9x8x128xbf16, #tpu.memory_space<vmem>>, vector<1x8x128xbf16>
    %16 = vector.shape_cast %15 : vector<1x8x128xbf16> to vector<8x128xbf16>
    %cst_10 = arith.constant dense<0.000000e+00> : vector<128x128xf32>
    %17 = tpu.matmul %14, %16, %cst_10 {dimension_numbers = #tpu.dot_dimension_numbers<[1], [0], [0], [1], [0, 0, 1, 1], [], []>} : vector<128x8xbf16>, vector<8x128xbf16>, vector<128x128xf32> -> vector<128x128xf32>
    %18 = arith.addf %11, %17 : vector<128x128xf32>
    %19 = vector.extract_strided_slice %3 {offsets = [0, 0, 2, 0], sizes = [8, 1, 16, 8], strides = [1, 1, 1, 1]} : vector<8x3x18x8xbf16> to vector<8x1x16x8xbf16>
    %20 = vector.shape_cast %19 : vector<8x1x16x8xbf16> to vector<8x16x8xbf16>
    %21 = vector.shape_cast %20 : vector<8x16x8xbf16> to vector<128x8xbf16>
    %c2 = arith.constant 2 : index
    %c0_11 = arith.constant 0 : index
    %c0_12 = arith.constant 0 : index
    %22 = vector.load %arg2[%c2, %c0_11, %c0_12] : memref<9x8x128xbf16, #tpu.memory_space<vmem>>, vector<1x8x128xbf16>
    %23 = vector.shape_cast %22 : vector<1x8x128xbf16> to vector<8x128xbf16>
    %cst_13 = arith.constant dense<0.000000e+00> : vector<128x128xf32>
    %24 = tpu.matmul %21, %23, %cst_13 {dimension_numbers = #tpu.dot_dimension_numbers<[1], [0], [0], [1], [0, 0, 1, 1], [], []>} : vector<128x8xbf16>, vector<8x128xbf16>, vector<128x128xf32> -> vector<128x128xf32>
    %25 = arith.addf %18, %24 : vector<128x128xf32>
    %26 = vector.extract_strided_slice %3 {offsets = [0, 1, 0, 0], sizes = [8, 1, 16, 8], strides = [1, 1, 1, 1]} : vector<8x3x18x8xbf16> to vector<8x1x16x8xbf16>
    %27 = vector.shape_cast %26 : vector<8x1x16x8xbf16> to vector<8x16x8xbf16>
    %28 = vector.shape_cast %27 : vector<8x16x8xbf16> to vector<128x8xbf16>
    %c3 = arith.constant 3 : index
    %c0_14 = arith.constant 0 : index
    %c0_15 = arith.constant 0 : index
    %29 = vector.load %arg2[%c3, %c0_14, %c0_15] : memref<9x8x128xbf16, #tpu.memory_space<vmem>>, vector<1x8x128xbf16>
    %30 = vector.shape_cast %29 : vector<1x8x128xbf16> to vector<8x128xbf16>
    %cst_16 = arith.constant dense<0.000000e+00> : vector<128x128xf32>
    %31 = tpu.matmul %28, %30, %cst_16 {dimension_numbers = #tpu.dot_dimension_numbers<[1], [0], [0], [1], [0, 0, 1, 1], [], []>} : vector<128x8xbf16>, vector<8x128xbf16>, vector<128x128xf32> -> vector<128x128xf32>
    %32 = arith.addf %25, %31 : vector<128x128xf32>
    %33 = vector.extract_strided_slice %3 {offsets = [0, 1, 1, 0], sizes = [8, 1, 16, 8], strides = [1, 1, 1, 1]} : vector<8x3x18x8xbf16> to vector<8x1x16x8xbf16>
    %34 = vector.shape_cast %33 : vector<8x1x16x8xbf16> to vector<8x16x8xbf16>
    %35 = vector.shape_cast %34 : vector<8x16x8xbf16> to vector<128x8xbf16>
    %c4 = arith.constant 4 : index
    %c0_17 = arith.constant 0 : index
    %c0_18 = arith.constant 0 : index
    %36 = vector.load %arg2[%c4, %c0_17, %c0_18] : memref<9x8x128xbf16, #tpu.memory_space<vmem>>, vector<1x8x128xbf16>
    %37 = vector.shape_cast %36 : vector<1x8x128xbf16> to vector<8x128xbf16>
    %cst_19 = arith.constant dense<0.000000e+00> : vector<128x128xf32>
    %38 = tpu.matmul %35, %37, %cst_19 {dimension_numbers = #tpu.dot_dimension_numbers<[1], [0], [0], [1], [0, 0, 1, 1], [], []>} : vector<128x8xbf16>, vector<8x128xbf16>, vector<128x128xf32> -> vector<128x128xf32>
    %39 = arith.addf %32, %38 : vector<128x128xf32>
    %40 = vector.extract_strided_slice %3 {offsets = [0, 1, 2, 0], sizes = [8, 1, 16, 8], strides = [1, 1, 1, 1]} : vector<8x3x18x8xbf16> to vector<8x1x16x8xbf16>
    %41 = vector.shape_cast %40 : vector<8x1x16x8xbf16> to vector<8x16x8xbf16>
    %42 = vector.shape_cast %41 : vector<8x16x8xbf16> to vector<128x8xbf16>
    %c5 = arith.constant 5 : index
    %c0_20 = arith.constant 0 : index
    %c0_21 = arith.constant 0 : index
    %43 = vector.load %arg2[%c5, %c0_20, %c0_21] : memref<9x8x128xbf16, #tpu.memory_space<vmem>>, vector<1x8x128xbf16>
    %44 = vector.shape_cast %43 : vector<1x8x128xbf16> to vector<8x128xbf16>
    %cst_22 = arith.constant dense<0.000000e+00> : vector<128x128xf32>
    %45 = tpu.matmul %42, %44, %cst_22 {dimension_numbers = #tpu.dot_dimension_numbers<[1], [0], [0], [1], [0, 0, 1, 1], [], []>} : vector<128x8xbf16>, vector<8x128xbf16>, vector<128x128xf32> -> vector<128x128xf32>
    %46 = arith.addf %39, %45 : vector<128x128xf32>
    %47 = vector.extract_strided_slice %3 {offsets = [0, 2, 0, 0], sizes = [8, 1, 16, 8], strides = [1, 1, 1, 1]} : vector<8x3x18x8xbf16> to vector<8x1x16x8xbf16>
    %48 = vector.shape_cast %47 : vector<8x1x16x8xbf16> to vector<8x16x8xbf16>
    %49 = vector.shape_cast %48 : vector<8x16x8xbf16> to vector<128x8xbf16>
    %c6 = arith.constant 6 : index
    %c0_23 = arith.constant 0 : index
    %c0_24 = arith.constant 0 : index
    %50 = vector.load %arg2[%c6, %c0_23, %c0_24] : memref<9x8x128xbf16, #tpu.memory_space<vmem>>, vector<1x8x128xbf16>
    %51 = vector.shape_cast %50 : vector<1x8x128xbf16> to vector<8x128xbf16>
    %cst_25 = arith.constant dense<0.000000e+00> : vector<128x128xf32>
    %52 = tpu.matmul %49, %51, %cst_25 {dimension_numbers = #tpu.dot_dimension_numbers<[1], [0], [0], [1], [0, 0, 1, 1], [], []>} : vector<128x8xbf16>, vector<8x128xbf16>, vector<128x128xf32> -> vector<128x128xf32>
    %53 = arith.addf %46, %52 : vector<128x128xf32>
    %54 = vector.extract_strided_slice %3 {offsets = [0, 2, 1, 0], sizes = [8, 1, 16, 8], strides = [1, 1, 1, 1]} : vector<8x3x18x8xbf16> to vector<8x1x16x8xbf16>
    %55 = vector.shape_cast %54 : vector<8x1x16x8xbf16> to vector<8x16x8xbf16>
    %56 = vector.shape_cast %55 : vector<8x16x8xbf16> to vector<128x8xbf16>
    %c7 = arith.constant 7 : index
    %c0_26 = arith.constant 0 : index
    %c0_27 = arith.constant 0 : index
    %57 = vector.load %arg2[%c7, %c0_26, %c0_27] : memref<9x8x128xbf16, #tpu.memory_space<vmem>>, vector<1x8x128xbf16>
    %58 = vector.shape_cast %57 : vector<1x8x128xbf16> to vector<8x128xbf16>
    %cst_28 = arith.constant dense<0.000000e+00> : vector<128x128xf32>
    %59 = tpu.matmul %56, %58, %cst_28 {dimension_numbers = #tpu.dot_dimension_numbers<[1], [0], [0], [1], [0, 0, 1, 1], [], []>} : vector<128x8xbf16>, vector<8x128xbf16>, vector<128x128xf32> -> vector<128x128xf32>
    %60 = arith.addf %53, %59 : vector<128x128xf32>
    %61 = vector.extract_strided_slice %3 {offsets = [0, 2, 2, 0], sizes = [8, 1, 16, 8], strides = [1, 1, 1, 1]} : vector<8x3x18x8xbf16> to vector<8x1x16x8xbf16>
    %62 = vector.shape_cast %61 : vector<8x1x16x8xbf16> to vector<8x16x8xbf16>
    %63 = vector.shape_cast %62 : vector<8x16x8xbf16> to vector<128x8xbf16>
    %c8 = arith.constant 8 : index
    %c0_29 = arith.constant 0 : index
    %c0_30 = arith.constant 0 : index
    %64 = vector.load %arg2[%c8, %c0_29, %c0_30] : memref<9x8x128xbf16, #tpu.memory_space<vmem>>, vector<1x8x128xbf16>
    %65 = vector.shape_cast %64 : vector<1x8x128xbf16> to vector<8x128xbf16>
    %cst_31 = arith.constant dense<0.000000e+00> : vector<128x128xf32>
    %66 = tpu.matmul %63, %65, %cst_31 {dimension_numbers = #tpu.dot_dimension_numbers<[1], [0], [0], [1], [0, 0, 1, 1], [], []>} : vector<128x8xbf16>, vector<8x128xbf16>, vector<128x128xf32> -> vector<128x128xf32>
    %67 = arith.addf %60, %66 : vector<128x128xf32>
    %68 = arith.truncf %67 : vector<128x128xf32> to vector<128x128xbf16>
    %c0_32 = arith.constant 0 : index
    %c0_33 = arith.constant 0 : index
    %69 = vector.load %arg3[%c0_32, %c0_33] : memref<128x128xbf16, #tpu.memory_space<vmem>>, vector<128x128xbf16>
    tpu.vector_store %arg3[%c0_32, %c0_33], %68 {strides = array<i32>} : memref<128x128xbf16, #tpu.memory_space<vmem>>, vector<128x128xbf16>,
    %c0_34 = arith.constant 0 : index
    %c0_35 = arith.constant 0 : index
    %70 = vector.load %arg4[%c0_34, %c0_35] : memref<1x128xf32, #tpu.memory_space<vmem>>, vector<1x128xf32>
    %cst_36 = arith.constant dense<0.000000e+00> : vector<128xf32>
    %71 = vector.multi_reduction <add>, %67, %cst_36 [0] : vector<128x128xf32> to vector<128xf32>
    %72 = vector.shape_cast %71 : vector<128xf32> to vector<1x128xf32>
    %73 = arith.addf %70, %72 : vector<1x128xf32>
    %c0_37 = arith.constant 0 : index
    %c0_38 = arith.constant 0 : index
    %74 = vector.load %arg4[%c0_37, %c0_38] : memref<1x128xf32, #tpu.memory_space<vmem>>, vector<1x128xf32>
    tpu.vector_store %arg4[%c0_37, %c0_38], %73 {strides = array<i32>} : memref<1x128xf32, #tpu.memory_space<vmem>>, vector<1x128xf32>,
    %c0_39 = arith.constant 0 : index
    %c0_40 = arith.constant 0 : index
    %75 = vector.load %arg5[%c0_39, %c0_40] : memref<1x128xf32, #tpu.memory_space<vmem>>, vector<1x128xf32>
    %76 = arith.mulf %67, %67 : vector<128x128xf32>
    %cst_41 = arith.constant dense<0.000000e+00> : vector<128xf32>
    %77 = vector.multi_reduction <add>, %76, %cst_41 [0] : vector<128x128xf32> to vector<128xf32>
    %78 = vector.shape_cast %77 : vector<128xf32> to vector<1x128xf32>
    %79 = arith.addf %75, %78 : vector<1x128xf32>
    %c0_42 = arith.constant 0 : index
    %c0_43 = arith.constant 0 : index
    %80 = vector.load %arg5[%c0_42, %c0_43] : memref<1x128xf32, #tpu.memory_space<vmem>>, vector<1x128xf32>
    tpu.vector_store %arg5[%c0_42, %c0_43], %79 {strides = array<i32>} : memref<1x128xf32, #tpu.memory_space<vmem>>, vector<1x128xf32>,
    return
  }
  func.func @transform_0(%arg0: i32) -> (i32, i32, i32, i32) {
    %c0_i32 = arith.constant 0 : i32
    %c0_i32_0 = arith.constant 0 : i32
    %c0_i32_1 = arith.constant 0 : i32
    %c0_i32_2 = arith.constant 0 : i32
    return %arg0, %c0_i32, %c0_i32_0, %c0_i32_1 : i32, i32, i32, i32
  }
  func.func @transform_1(%arg0: i32) -> (i32, i32, i32) {
    %c0_i32 = arith.constant 0 : i32
    %c0_i32_0 = arith.constant 0 : i32
    %c0_i32_1 = arith.constant 0 : i32
    %c0_i32_2 = arith.constant 0 : i32
    return %c0_i32, %c0_i32_0, %c0_i32_1 : i32, i32, i32
  }
  func.func @transform_2(%arg0: i32) -> (i32, i32) {
    %c0_i32 = arith.constant 0 : i32
    %c0_i32_0 = arith.constant 0 : i32
    return %arg0, %c0_i32 : i32, i32
  }
  func.func @transform_3(%arg0: i32) -> (i32, i32) {
    %c0_i32 = arith.constant 0 : i32
    %c0_i32_0 = arith.constant 0 : i32
    %c0_i32_1 = arith.constant 0 : i32
    return %c0_i32, %c0_i32_0 : i32, i32
  }
  func.func @transform_4(%arg0: i32) -> (i32, i32) {
    %c0_i32 = arith.constant 0 : i32
    %c0_i32_0 = arith.constant 0 : i32
    %c0_i32_1 = arith.constant 0 : i32
    return %c0_i32, %c0_i32_0 : i32, i32
  }
}

</mosaic_0001>

<llo_original>
// kernel: tpu_custom_call.1
$region0: #{tpu_custom_call.1}
  #allocation0 [shape = 'u32[]', space=smem, size = 0x4, offset = 0x4, fixed_abs, tag = 'smem constant byte address 0x4 - core index']
  #allocation1 [shape = 'u32[144,128]{1,0:T(1,128)}', space=vmem, size = 0x12000, scoped, tag = 'internal scratch']
  %s0 = inlined_call_operand.hbm [shape: bf16[32,3,18,8], index: 0, kind: input, shape index: {}]
  %s1 = inlined_call_operand.hbm [shape: bf16[9,8,128], index: 1, kind: input, shape index: {}]
  %s2 = inlined_call_operand.hbm [shape: bf16[512,128], index: 2, kind: output, shape index: {0}]
  %s3 = inlined_call_operand.hbm [shape: f32[1,128], index: 3, kind: output, shape index: {1}]
  %s4 = inlined_call_operand.hbm [shape: f32[1,128], index: 4, kind: output, shape index: {2}]
  %5 = xla_tuple %s2, %s3, %s4
  %s6 = sld [smem:[#allocation0]]
  $region69: #{tpu_custom_call.1} parent=0
    _
  %s8 = ssub.s32 1, %s6
  %s9 = scalar_select 0, %s8, %s6
  $region1: #{tpu_custom_call.1} parent=0
    #allocation2 [shape = 'u8[294912]{0}', space=vmem, size = 0x48000, scoped, tag = 'input window, operand 0']
    #allocation3 [shape = 's32[2]{0}', space=sflag, size = 0x8, scoped, tag = 'scoped memory for tpu_custom_call.1']
    #allocation4 [shape = 's32[2]{0}', space=sflag, size = 0x8, scoped, tag = 'scoped memory for tpu_custom_call.1']
    #allocation5 [shape = 'u8[18432]{0}', space=vmem, size = 0x4800, scoped, tag = 'input window, operand 1, single buffered']
    #allocation6 [shape = 's32[1]{0}', space=sflag, size = 0x4, scoped, tag = 'scoped memory for tpu_custom_call.1']
    #allocation7 [shape = 'u8[65536]{0}', space=vmem, size = 0x10000, scoped, tag = 'output window, operand 0']
    #allocation8 [shape = 'u8[512]{0}', space=vmem, size = 0x400, scoped, tag = 'output window, operand 1, single buffered']
    #allocation9 [shape = 's32[1]{0}', space=sflag, size = 0x4, scoped, tag = 'scoped memory for tpu_custom_call.1']
    #allocation10 [shape = 'u8[512]{0}', space=vmem, size = 0x400, scoped, tag = 'output window, operand 2, single buffered']
    %10 = vsyncpa [#allocation3], 0
    %s11 = scalar_lea.sflag [#allocation3], 1
    %12 = vsyncpa %s11, 0
    %13 = vsyncpa [#allocation6], 0
    %14 = vsyncpa [#allocation4], 0
    %s15 = scalar_lea.sflag [#allocation4], 1
    %16 = vsyncpa %s15, 0
    %17 = vsyncpa [#allocation9], 0
    loop: start=0, step=1, limit=6
    $region2: #{tpu_custom_call.1} parent=1 // loop_pre_header
      _
    $region3: #{tpu_custom_call.1} parent=1 // loop_header
      %s19 = sphi 0, %s23
      %p20 = scmp.ge.s32.totalorder %s19, 6
      %s29 = sphi 0, %s31
      %s32 = sphi 0, %s29
      %s33 = sphi 0, %s32
      %s49 = sphi 0, %s33
      %s53 = sphi 0, %s53
      %s55 = sphi 0, %s53
      %s56 = sphi 0, %s55
      %s70 = sphi 0, %s56
      %s76 = sphi 0, %s78
      %s79 = sphi 0, %s76
      %s80 = sphi 0, %s79
      %s96 = sphi 0, %s80
      %s100 = sphi 0, %s100
      %s102 = sphi 0, %s100
      %s103 = sphi 0, %s102
      %s117 = sphi 0, %s103
      %s121 = sphi 0, %s121
      %s123 = sphi 0, %s121
      %s124 = sphi 0, %s123
      %s138 = sphi 0, %s124
    $region4: #{tpu_custom_call.1} parent=1 // loop_header_branch
      %22 = sbr.rel (%p20) target = $region8
    $region5: #{tpu_custom_call.1} parent=1 // loop_body
      %s24 = ssub.s32 %s19, 1
      %s25 = ssub.s32 %s19, 2
      %s26 = sadd.s32 %s19, 1
      %s27 = ssub.s32 %s19, %s26
      %p28 = scmp.eq.s32.totalorder %s27, 0
      %s30 = sadd.s32 %s29, 1
      %s31 = scalar_select %p28, %s29, %s30
      %p34 = pneg %p28
      %p35 = scmp.eq.s32.totalorder %s19, 3
      %p36 = por %p34, %p35
      %p37 = scmp.ne.s32.totalorder %s29, %s32
      %p38 = scmp.eq.s32.totalorder %s19, 0
      %p39 = por %p37, %p38
      %p40 = scmp.ne.s32.totalorder %s29, %s32
      %p41 = scmp.eq.s32.totalorder %s24, 3
      %p42 = por %p40, %p41
      %p43 = scmp.ne.s32.totalorder %s32, %s33
      %p44 = scmp.eq.s32.totalorder %s24, 0
      %p45 = por %p43, %p44
      %p46 = scmp.ne.s32.totalorder %s32, %s33
      %p47 = scmp.eq.s32.totalorder %s25, 3
      %p48 = por %p46, %p47
      %p50 = scmp.ne.s32.totalorder %s33, %s49
      %p51 = scmp.eq.s32.totalorder %s25, 0
      %p52 = por %p50, %p51
      %s54 = sadd.s32 %s53, 1
      %p57 = scmp.eq.s32.totalorder %s19, 3
      %p58 = scmp.ne.s32.totalorder %s53, %s55
      %p59 = scmp.eq.s32.totalorder %s19, 0
      %p60 = por %p58, %p59
      %p61 = scmp.ne.s32.totalorder %s53, %s55
      %p62 = scmp.eq.s32.totalorder %s24, 3
      %p63 = por %p61, %p62
      %p64 = scmp.ne.s32.totalorder %s55, %s56
      %p65 = scmp.eq.s32.totalorder %s24, 0
      %p66 = por %p64, %p65
      %p67 = scmp.ne.s32.totalorder %s55, %s56
      %p68 = scmp.eq.s32.totalorder %s25, 3
      %p69 = por %p67, %p68
      %p71 = scmp.ne.s32.totalorder %s56, %s70
      %p72 = scmp.eq.s32.totalorder %s25, 0
      %p73 = por %p71, %p72
      %s74 = ssub.s32 %s19, %s26
      %p75 = scmp.eq.s32.totalorder %s74, 0
      %s77 = sadd.s32 %s76, 1
      %s78 = scalar_select %p75, %s76, %s77
      %p81 = pneg %p75
      %p82 = scmp.eq.s32.totalorder %s19, 3
      %p83 = por %p81, %p82
      %p84 = scmp.ne.s32.totalorder %s76, %s79
      %p85 = scmp.eq.s32.totalorder %s19, 0
      %p86 = por %p84, %p85
      %p87 = scmp.ne.s32.totalorder %s76, %s79
      %p88 = scmp.eq.s32.totalorder %s24, 3
      %p89 = por %p87, %p88
      %p90 = scmp.ne.s32.totalorder %s79, %s80
      %p91 = scmp.eq.s32.totalorder %s24, 0
      %p92 = por %p90, %p91
      %p93 = scmp.ne.s32.totalorder %s79, %s80
      %p94 = scmp.eq.s32.totalorder %s25, 3
      %p95 = por %p93, %p94
      %p97 = scmp.ne.s32.totalorder %s80, %s96
      %p98 = scmp.eq.s32.totalorder %s25, 0
      %p99 = por %p97, %p98
      %s101 = sadd.s32 %s100, 1
      %p104 = scmp.eq.s32.totalorder %s19, 3
      %p105 = scmp.ne.s32.totalorder %s100, %s102
      %p106 = scmp.eq.s32.totalorder %s19, 0
      %p107 = por %p105, %p106
      %p108 = scmp.ne.s32.totalorder %s100, %s102
      %p109 = scmp.eq.s32.totalorder %s24, 3
      %p110 = por %p108, %p109
      %p111 = scmp.ne.s32.totalorder %s102, %s103
      %p112 = scmp.eq.s32.totalorder %s24, 0
      %p113 = por %p111, %p112
      %p114 = scmp.ne.s32.totalorder %s102, %s103
      %p115 = scmp.eq.s32.totalorder %s25, 3
      %p116 = por %p114, %p115
      %p118 = scmp.ne.s32.totalorder %s103, %s117
      %p119 = scmp.eq.s32.totalorder %s25, 0
      %p120 = por %p118, %p119
      %s122 = sadd.s32 %s121, 1
      %p125 = scmp.eq.s32.totalorder %s19, 3
      %p126 = scmp.ne.s32.totalorder %s121, %s123
      %p127 = scmp.eq.s32.totalorder %s19, 0
      %p128 = por %p126, %p127
      %p129 = scmp.ne.s32.totalorder %s121, %s123
      %p130 = scmp.eq.s32.totalorder %s24, 3
      %p131 = por %p129, %p130
      %p132 = scmp.ne.s32.totalorder %s123, %s124
      %p133 = scmp.eq.s32.totalorder %s24, 0
      %p134 = por %p132, %p133
      %p135 = scmp.ne.s32.totalorder %s123, %s124
      %p136 = scmp.eq.s32.totalorder %s25, 3
      %p137 = por %p135, %p136
      %p139 = scmp.ne.s32.totalorder %s124, %s138
      %p140 = scmp.eq.s32.totalorder %s25, 0
      %p141 = por %p139, %p140
      %p142 = scmp.le.s32.totalorder 1, %s19
      %p143 = scmp.lt.s32.totalorder %s19, 5
      %p144 = pnand %p142, %p143
      %p145 = pneg %p144
      // Predicated region
      $region9: #{tpu_custom_call.1} parent=5 // pred_check
        _
      $region10: #{tpu_custom_call.1} parent=5 // pred_check_branch
        %147 = sbr.rel (%p144) target = $region12
      $region11: #{tpu_custom_call.1} parent=5 // pred_region
        %s148 = ssub.s32 %s19, 1
        // Predicated region
        $region13: #{tpu_custom_call.1} parent=11 // pred_check
          %p149 = pneg %p66
        $region14: #{tpu_custom_call.1} parent=11 // pred_check_branch
          %151 = sbr.rel (%p149) target = $region16
        $region15: #{tpu_custom_call.1} parent=11 // pred_region
          %s153 = ssub.s32 576, 576
          %154 = vsyncadd [#allocation6], %s153
          %s155 = sshll.u32 [#allocation5], 4
          %s156 = int_to_ptr.vmem [resolvable:$true] %s155
          %161 = dma.hbm_to_vmem [thread:$0]  %s1, 576, %s156, [#allocation6], 64, 64, 4
        $region16: #{tpu_custom_call.1} parent=11 // pred_fallthru
          _
      $region12: #{tpu_custom_call.1} parent=5 // pred_fallthru
        _
      %p162 = scmp.lt.s32.totalorder %s19, 4
      // Predicated region
      $region17: #{tpu_custom_call.1} parent=5 // pred_check
        %p163 = pneg %p162
      $region18: #{tpu_custom_call.1} parent=5 // pred_check_branch
        %165 = sbr.rel (%p163) target = $region20
      $region19: #{tpu_custom_call.1} parent=5 // pred_region
        // Predicated region
        $region21: #{tpu_custom_call.1} parent=19 // pred_check
          %p166 = pneg %p39
        $region22: #{tpu_custom_call.1} parent=19 // pred_check_branch
          %168 = sbr.rel (%p166) target = $region24
        $region23: #{tpu_custom_call.1} parent=19 // pred_region
          %s169 = sand.u32 %s29, 1
          %s170 = scalar_lea.sflag [#allocation3], %s169
          %s171 = sand.u32 %s29, 1
          %s172 = smul.addr %s171, 288
          %s173 = scalar_lea.vmem [#allocation2], %s172
          %s174 = smul.u32 8, %s19
          %s176 = ssub.s32 4608, 4608
          %177 = vsyncadd %s170, %s176
          %s178 = smul.addr %s174, 9
          %s179 = smul.addr %s178, 64
          %s180 = scalar_lea.hbm %s0, %s179
          %s181 = sshll.u32 %s173, 4
          %s182 = int_to_ptr.vmem [resolvable:$true] %s181
          %187 = dma.hbm_to_vmem [thread:$0]  %s180, 4608, %s182, %s170, 64, 64, 4
        $region24: #{tpu_custom_call.1} parent=19 // pred_fallthru
          _
      $region20: #{tpu_custom_call.1} parent=5 // pred_fallthru
        _
      %p188 = scmp.le.s32.totalorder 1, %s19
      %p189 = scmp.lt.s32.totalorder %s19, 5
      %p190 = pnand %p188, %p189
      %p191 = pneg %p190
      // Predicated region
      $region25: #{tpu_custom_call.1} parent=5 // pred_check
        _
      $region26: #{tpu_custom_call.1} parent=5 // pred_check_branch
        %193 = sbr.rel (%p190) target = $region28
      $region27: #{tpu_custom_call.1} parent=5 // pred_region
        %s194 = ssub.s32 %s19, 1
        %s195 = sand.u32 %s32, 1
        %s196 = scalar_lea.sflag [#allocation3], %s195
        %s197 = sand.u32 %s32, 1
        %s198 = smul.addr %s197, 288
        %s199 = scalar_lea.vmem [#allocation2], %s198
        // Predicated region
        $region29: #{tpu_custom_call.1} parent=27 // pred_check
          %p200 = pneg %p45
        $region30: #{tpu_custom_call.1} parent=27 // pred_check_branch
          %202 = sbr.rel (%p200) target = $region32
        $region31: #{tpu_custom_call.1} parent=27 // pred_region
          %203 = dma.done %s196, 4608
        $region32: #{tpu_custom_call.1} parent=27 // pred_fallthru
          _
        // Predicated region
        $region33: #{tpu_custom_call.1} parent=27 // pred_check
          %p204 = pneg %p66
        $region34: #{tpu_custom_call.1} parent=27 // pred_check_branch
          %206 = sbr.rel (%p204) target = $region36
        $region35: #{tpu_custom_call.1} parent=27 // pred_region
          %207 = dma.done [#allocation6], 576
        $region36: #{tpu_custom_call.1} parent=27 // pred_fallthru
          _
        %s208 = sand.u32 %s32, 1
        %s209 = scalar_lea.sflag [#allocation3], %s208
        %s210 = sand.u32 %s32, 1
        %s211 = smul.addr %s210, 288
        %s212 = scalar_lea.vmem [#allocation2], %s211
        %p213 = pneg %p45
        %p214 = pneg %p42
        %p215 = pneg %p66
        %p216 = pneg %p63
        %p217 = pneg %p92
        %p218 = pneg %p89
        %s219 = sand.u32 %s79, 1
        %s220 = scalar_lea.sflag [#allocation4], %s219
        %s221 = sand.u32 %s79, 1
        %s222 = smul.addr %s221, 64
        %s223 = scalar_lea.vmem [#allocation7], %s222
        %p224 = pneg %p113
        %p225 = pneg %p110
        %p226 = pneg %p134
        %p227 = pneg %p131
        %s228 = smul.u32 8, %s24
        %s229 = smul.u32 16, %s24
        %p231 = scmp.eq.s32.totalorder %s24, 0
        // Predicated region
        $region37: #{tpu_custom_call.1} parent=27 // pred_check
          %p232 = pneg %p231
        $region38: #{tpu_custom_call.1} parent=27 // pred_check_branch
          %234 = sbr.rel (%p232) target = $region40
        $region39: #{tpu_custom_call.1} parent=27 // pred_region
          %235 = vst [vmem:[#allocation8] sm:$0x1] 0.0
          %236 = vst [vmem:[#allocation10] sm:$0x1] 0.0
        $region40: #{tpu_custom_call.1} parent=27 // pred_fallthru
          _
        %v237 = vld [vmem:[%s199] sm:$0xf]
        %v238 = vld [vmem:[%s199 + $0x4] sm:$0xf]
        %v239 = vld [vmem:[%s199 + $0x8] sm:$0x1]
        %v240 = vld [vmem:[%s199 + $0xc] sm:$0xf]
        %v241 = vld [vmem:[%s199 + $0x10] sm:$0xf]
        %v242 = vld [vmem:[%s199 + $0x14] sm:$0x1]
        %v243 = vld [vmem:[%s199 + $0x18] sm:$0xf]
        %v244 = vld [vmem:[%s199 + $0x1c] sm:$0xf]
        %v245 = vld [vmem:[%s199 + $0x20] sm:$0x1]
        %v246 = vld [vmem:[%s199 + $0x24] sm:$0xf]
        %v247 = vld [vmem:[%s199 + $0x28] sm:$0xf]
        %v248 = vld [vmem:[%s199 + $0x2c] sm:$0x1]
        %v249 = vld [vmem:[%s199 + $0x30] sm:$0xf]
        %v250 = vld [vmem:[%s199 + $0x34] sm:$0xf]
        %v251 = vld [vmem:[%s199 + $0x38] sm:$0x1]
        %v252 = vld [vmem:[%s199 + $0x3c] sm:$0xf]
        %v253 = vld [vmem:[%s199 + $0x40] sm:$0xf]
        %v254 = vld [vmem:[%s199 + $0x44] sm:$0x1]
        %v255 = vld [vmem:[%s199 + $0x48] sm:$0xf]
        %v256 = vld [vmem:[%s199 + $0x4c] sm:$0xf]
        %v257 = vld [vmem:[%s199 + $0x50] sm:$0x1]
        %v258 = vld [vmem:[%s199 + $0x54] sm:$0xf]
        %v259 = vld [vmem:[%s199 + $0x58] sm:$0xf]
        %v260 = vld [vmem:[%s199 + $0x5c] sm:$0x1]
        %v261 = vld [vmem:[%s199 + $0x60] sm:$0xf]
        %v262 = vld [vmem:[%s199 + $0x64] sm:$0xf]
        %v263 = vld [vmem:[%s199 + $0x68] sm:$0x1]
        %v264 = vld [vmem:[%s199 + $0x6c] sm:$0xf]
        %v265 = vld [vmem:[%s199 + $0x70] sm:$0xf]
        %v266 = vld [vmem:[%s199 + $0x74] sm:$0x1]
        %v267 = vld [vmem:[%s199 + $0x78] sm:$0xf]
        %v268 = vld [vmem:[%s199 + $0x7c] sm:$0xf]
        %v269 = vld [vmem:[%s199 + $0x80] sm:$0x1]
        %v270 = vld [vmem:[%s199 + $0x84] sm:$0xf]
        %v271 = vld [vmem:[%s199 + $0x88] sm:$0xf]
        %v272 = vld [vmem:[%s199 + $0x8c] sm:$0x1]
        %v273 = vld [vmem:[%s199 + $0x90] sm:$0xf]
        %v274 = vld [vmem:[%s199 + $0x94] sm:$0xf]
        %v275 = vld [vmem:[%s199 + $0x98] sm:$0x1]
        %v276 = vld [vmem:[%s199 + $0x9c] sm:$0xf]
        %v277 = vld [vmem:[%s199 + $0xa0] sm:$0xf]
        %v278 = vld [vmem:[%s199 + $0xa4] sm:$0x1]
        %v279 = vld [vmem:[%s199 + $0xa8] sm:$0xf]
        %v280 = vld [vmem:[%s199 + $0xac] sm:$0xf]
        %v281 = vld [vmem:[%s199 + $0xb0] sm:$0x1]
        %v282 = vld [vmem:[%s199 + $0xb4] sm:$0xf]
        %v283 = vld [vmem:[%s199 + $0xb8] sm:$0xf]
        %v284 = vld [vmem:[%s199 + $0xbc] sm:$0x1]
        %v285 = vld [vmem:[%s199 + $0xc0] sm:$0xf]
        %v286 = vld [vmem:[%s199 + $0xc4] sm:$0xf]
        %v287 = vld [vmem:[%s199 + $0xc8] sm:$0x1]
        %v288 = vld [vmem:[%s199 + $0xcc] sm:$0xf]
        %v289 = vld [vmem:[%s199 + $0xd0] sm:$0xf]
        %v290 = vld [vmem:[%s199 + $0xd4] sm:$0x1]
        %v291 = vld [vmem:[%s199 + $0xd8] sm:$0xf]
        %v292 = vld [vmem:[%s199 + $0xdc] sm:$0xf]
        %v293 = vld [vmem:[%s199 + $0xe0] sm:$0x1]
        %v294 = vld [vmem:[%s199 + $0xe4] sm:$0xf]
        %v295 = vld [vmem:[%s199 + $0xe8] sm:$0xf]
        %v296 = vld [vmem:[%s199 + $0xec] sm:$0x1]
        %v297 = vld [vmem:[%s199 + $0xf0] sm:$0xf]
        %v298 = vld [vmem:[%s199 + $0xf4] sm:$0xf]
        %v299 = vld [vmem:[%s199 + $0xf8] sm:$0x1]
        %v300 = vld [vmem:[%s199 + $0xfc] sm:$0xf]
        %v301 = vld [vmem:[%s199 + $0x100] sm:$0xf]
        %v302 = vld [vmem:[%s199 + $0x104] sm:$0x1]
        %v303 = vld [vmem:[%s199 + $0x108] sm:$0xf]
        %v304 = vld [vmem:[%s199 + $0x10c] sm:$0xf]
        %v305 = vld [vmem:[%s199 + $0x110] sm:$0x1]
        %v306 = vld [vmem:[%s199 + $0x114] sm:$0xf]
        %v307 = vld [vmem:[%s199 + $0x118] sm:$0xf]
        %v308 = vld [vmem:[%s199 + $0x11c] sm:$0x1]
        %v309 = vld [vmem:[#allocation5] sm:$0xf]
        %vm310 = vsmask.f32 3328
        %vm311 = vsmask.f32 7440
        %vm312 = vmor %vm310, %vm311
        %v314 = vshrl.u32 %v237, 16
        %v316 = vrot.slane %v314, 4
        %v317 = vshll.u32 %v237, 16
        %v319 = vrot.slane %v317, 5
        %v320 = vor.u32 %v316, %v319
        %v321 = vrot.slane %v320, 4
        %v323 = vshll.u32 %v238, 16
        %v325 = vrot.slane %v323, 5
        %v326 = vsel %vm312, %v321, %v325
        %v327 = vshrl.u32 %v238, 16
        %v329 = vrot.slane %v327, 4
        %v330 = vor.u32 %v329, %v325
        %v331 = vrot.slane %v330, 4
        %v333 = vshll.u32 %v239, 16
        %v335 = vrot.slane %v333, 5
        %v336 = vsel %vm312, %v331, %v335
        %v338 = vshrl.u32 %v246, 16
        %v340 = vrot.slane %v338, 4
        %v341 = vshll.u32 %v246, 16
        %v343 = vrot.slane %v341, 5
        %v344 = vor.u32 %v340, %v343
        %v345 = vrot.slane %v344, 4
        %v347 = vshll.u32 %v247, 16
        %v349 = vrot.slane %v347, 5
        %v350 = vsel %vm312, %v345, %v349
        %v351 = vshrl.u32 %v247, 16
        %v353 = vrot.slane %v351, 4
        %v354 = vor.u32 %v353, %v349
        %v355 = vrot.slane %v354, 4
        %v357 = vshll.u32 %v248, 16
        %v359 = vrot.slane %v357, 5
        %v360 = vsel %vm312, %v355, %v359
        %v362 = vshrl.u32 %v255, 16
        %v364 = vrot.slane %v362, 4
        %v365 = vshll.u32 %v255, 16
        %v367 = vrot.slane %v365, 5
        %v368 = vor.u32 %v364, %v367
        %v369 = vrot.slane %v368, 4
        %v371 = vshll.u32 %v256, 16
        %v373 = vrot.slane %v371, 5
        %v374 = vsel %vm312, %v369, %v373
        %v375 = vshrl.u32 %v256, 16
        %v377 = vrot.slane %v375, 4
        %v378 = vor.u32 %v377, %v373
        %v379 = vrot.slane %v378, 4
        %v381 = vshll.u32 %v257, 16
        %v383 = vrot.slane %v381, 5
        %v384 = vsel %vm312, %v379, %v383
        %v386 = vshrl.u32 %v264, 16
        %v388 = vrot.slane %v386, 4
        %v389 = vshll.u32 %v264, 16
        %v391 = vrot.slane %v389, 5
        %v392 = vor.u32 %v388, %v391
        %v393 = vrot.slane %v392, 4
        %v395 = vshll.u32 %v265, 16
        %v397 = vrot.slane %v395, 5
        %v398 = vsel %vm312, %v393, %v397
        %v399 = vshrl.u32 %v265, 16
        %v401 = vrot.slane %v399, 4
        %v402 = vor.u32 %v401, %v397
        %v403 = vrot.slane %v402, 4
        %v405 = vshll.u32 %v266, 16
        %v407 = vrot.slane %v405, 5
        %v408 = vsel %vm312, %v403, %v407
        %v410 = vshrl.u32 %v273, 16
        %v412 = vrot.slane %v410, 4
        %v413 = vshll.u32 %v273, 16
        %v415 = vrot.slane %v413, 5
        %v416 = vor.u32 %v412, %v415
        %v417 = vrot.slane %v416, 4
        %v419 = vshll.u32 %v274, 16
        %v421 = vrot.slane %v419, 5
        %v422 = vsel %vm312, %v417, %v421
        %v423 = vshrl.u32 %v274, 16
        %v425 = vrot.slane %v423, 4
        %v426 = vor.u32 %v425, %v421
        %v427 = vrot.slane %v426, 4
        %v429 = vshll.u32 %v275, 16
        %v431 = vrot.slane %v429, 5
        %v432 = vsel %vm312, %v427, %v431
        %v434 = vshrl.u32 %v282, 16
        %v436 = vrot.slane %v434, 4
        %v437 = vshll.u32 %v282, 16
        %v439 = vrot.slane %v437, 5
        %v440 = vor.u32 %v436, %v439
        %v441 = vrot.slane %v440, 4
        %v443 = vshll.u32 %v283, 16
        %v445 = vrot.slane %v443, 5
        %v446 = vsel %vm312, %v441, %v445
        %v447 = vshrl.u32 %v283, 16
        %v449 = vrot.slane %v447, 4
        %v450 = vor.u32 %v449, %v445
        %v451 = vrot.slane %v450, 4
        %v453 = vshll.u32 %v284, 16
        %v455 = vrot.slane %v453, 5
        %v456 = vsel %vm312, %v451, %v455
        %v458 = vshrl.u32 %v291, 16
        %v460 = vrot.slane %v458, 4
        %v461 = vshll.u32 %v291, 16
        %v463 = vrot.slane %v461, 5
        %v464 = vor.u32 %v460, %v463
        %v465 = vrot.slane %v464, 4
        %v467 = vshll.u32 %v292, 16
        %v469 = vrot.slane %v467, 5
        %v470 = vsel %vm312, %v465, %v469
        %v471 = vshrl.u32 %v292, 16
        %v473 = vrot.slane %v471, 4
        %v474 = vor.u32 %v473, %v469
        %v475 = vrot.slane %v474, 4
        %v477 = vshll.u32 %v293, 16
        %v479 = vrot.slane %v477, 5
        %v480 = vsel %vm312, %v475, %v479
        %v482 = vshrl.u32 %v300, 16
        %v484 = vrot.slane %v482, 4
        %v485 = vshll.u32 %v300, 16
        %v487 = vrot.slane %v485, 5
        %v488 = vor.u32 %v484, %v487
        %v489 = vrot.slane %v488, 4
        %v491 = vshll.u32 %v301, 16
        %v493 = vrot.slane %v491, 5
        %v494 = vsel %vm312, %v489, %v493
        %v495 = vshrl.u32 %v301, 16
        %v497 = vrot.slane %v495, 4
        %v498 = vor.u32 %v497, %v493
        %v499 = vrot.slane %v498, 4
        %v501 = vshll.u32 %v302, 16
        %v503 = vrot.slane %v501, 5
        %v504 = vsel %vm312, %v499, %v503
        %s505 = scalar_lea.vmem [#allocation5], 4
        %v506 = vld [vmem:[%s505] sm:$0xf]
        %v507 = vunpack.c.l.b16 %v326
        %v508 = vunpack.c.l.b16 %v336
        %v509 = vunpack.c.l.b16 %v350
        %v510 = vunpack.c.l.b16 %v360
        %v511 = vunpack.c.l.b16 %v374
        %v512 = vunpack.c.l.b16 %v384
        %v513 = vunpack.c.l.b16 %v398
        %v514 = vunpack.c.l.b16 %v408
        %v515 = vunpack.c.l.b16 %v422
        %v516 = vunpack.c.l.b16 %v432
        %v517 = vunpack.c.l.b16 %v446
        %v518 = vunpack.c.l.b16 %v456
        %v519 = vunpack.c.l.b16 %v470
        %v520 = vunpack.c.l.b16 %v480
        %v521 = vunpack.c.l.b16 %v494
        %v522 = vunpack.c.l.b16 %v504
        %v523 = vpack.c.b16 %v508, %v507
        %v524 = vpack.c.b16 %v510, %v509
        %v525 = vpack.c.b16 %v512, %v511
        %v526 = vpack.c.b16 %v514, %v513
        %v527 = vpack.c.b16 %v516, %v515
        %v528 = vpack.c.b16 %v518, %v517
        %v529 = vpack.c.b16 %v520, %v519
        %v530 = vpack.c.b16 %v522, %v521
        %vm531 = vcmask 64512
        %v533 = vsel %vm531, %v523, 0
        %v536 = vsel %vm531, %v524, 0
        %v539 = vsel %vm531, %v525, 0
        %v542 = vsel %vm531, %v526, 0
        %v545 = vsel %vm531, %v527, 0
        %v548 = vsel %vm531, %v528, 0
        %v551 = vsel %vm531, %v529, 0
        %v554 = vsel %vm531, %v530, 0
        %vm556 = vcmask 1043456
        %v558 = vsel %vm556, %v506, 0
        %560 = vmatprep.subr.bf16.mxu0 0
        %561 = vmatpush1.bf16.msra.mxu0 %v558
        %562 = vmatprep.subr.bf16.mxu0 0
        %563 = vmatpush1.bf16.msra.mxu0 0
        %564 = vmatprep.subr.bf16.mxu0 0
        %565 = vmatpush1.bf16.msra.mxu0 0
        %566 = vmatprep.subr.bf16.mxu0 0
        %567 = vmatpush1.bf16.msra.mxu0 0
        %568 = vmatprep.subr.bf16.mxu0 0
        %569 = vmatpush1.bf16.msra.mxu0 0
        %570 = vmatprep.subr.bf16.mxu0 0
        %571 = vmatpush1.bf16.msra.mxu0 0
        %572 = vmatprep.subr.bf16.mxu0 0
        %573 = vmatpush1.bf16.msra.mxu0 0
        %574 = vmatprep.subr.bf16.mxu0 0
        %575 = vmatpush1.bf16.msra.mxu0 0
        %576 = vmatprep.subr.bf16.mxu0 0
        %577 = vmatpush1.bf16.msra.mxu0 0
        %578 = vmatprep.subr.bf16.mxu0 0
        %579 = vmatpush1.bf16.msra.mxu0 0
        %580 = vmatprep.subr.bf16.mxu0 0
        %581 = vmatpush1.bf16.msra.mxu0 0
        %582 = vmatprep.subr.bf16.mxu0 0
        %583 = vmatpush1.bf16.msra.mxu0 0
        %584 = vmatprep.subr.bf16.mxu0 0
        %585 = vmatpush1.bf16.msra.mxu0 0
        %586 = vmatprep.subr.bf16.mxu0 0
        %587 = vmatpush1.bf16.msra.mxu0 0
        %588 = vmatprep.subr.bf16.mxu0 0
        %589 = vmatpush1.bf16.msra.mxu0 0
        %590 = vmatprep.subr.bf16.mxu0 0
        %591 = vmatpush1.bf16.msra.mxu0 0
        %592 = vmatprep.mubr.bf16.mxu0 0
        %593 = vmatmul.mubr.bf16.gmra.mrb[0].mxu0 %v533
        %v594 = vpop.f32.mrb[0].mxu0
        %v595 = vadd.f32 0.0, %v594
        %v596 = vpop.f32.mrb[0].mxu0
        %v597 = vpop.f32.mrb[0].mxu0
        %v598 = vadd.f32 0.0, %v597
        %v599 = vpop.f32.mrb[0].mxu0
        %600 = vmatprep.mubr.bf16.mxu0 0
        %601 = vmatmul.mubr.bf16.gmra.mrb[0].mxu0 %v536
        %v602 = vpop.f32.mrb[0].mxu0
        %v603 = vadd.f32 0.0, %v602
        %v604 = vpop.f32.mrb[0].mxu0
        %v605 = vpop.f32.mrb[0].mxu0
        %v606 = vadd.f32 0.0, %v605
        %v607 = vpop.f32.mrb[0].mxu0
        %608 = vmatprep.mubr.bf16.mxu0 0
        %609 = vmatmul.mubr.bf16.gmra.mrb[0].mxu0 %v539
        %v610 = vpop.f32.mrb[0].mxu0
        %v611 = vadd.f32 0.0, %v610
        %v612 = vpop.f32.mrb[0].mxu0
        %v613 = vpop.f32.mrb[0].mxu0
        %v614 = vadd.f32 0.0, %v613
        %v615 = vpop.f32.mrb[0].mxu0
        %616 = vmatprep.mubr.bf16.mxu0 0
        %617 = vmatmul.mubr.bf16.gmra.mrb[0].mxu0 %v542
        %v618 = vpop.f32.mrb[0].mxu0
        %v619 = vadd.f32 0.0, %v618
        %v620 = vpop.f32.mrb[0].mxu0
        %v621 = vpop.f32.mrb[0].mxu0
        %v622 = vadd.f32 0.0, %v621
        %v623 = vpop.f32.mrb[0].mxu0
        %624 = vmatprep.mubr.bf16.mxu0 0
        %625 = vmatmul.mubr.bf16.gmra.mrb[0].mxu0 %v545
        %v626 = vpop.f32.mrb[0].mxu0
        %v627 = vadd.f32 0.0, %v626
        %v628 = vpop.f32.mrb[0].mxu0
        %v629 = vpop.f32.mrb[0].mxu0
        %v630 = vadd.f32 0.0, %v629
        %v631 = vpop.f32.mrb[0].mxu0
        %632 = vmatprep.mubr.bf16.mxu0 0
        %633 = vmatmul.mubr.bf16.gmra.mrb[0].mxu0 %v548
        %v634 = vpop.f32.mrb[0].mxu0
        %v635 = vadd.f32 0.0, %v634
        %v636 = vpop.f32.mrb[0].mxu0
        %v637 = vpop.f32.mrb[0].mxu0
        %v638 = vadd.f32 0.0, %v637
        %v639 = vpop.f32.mrb[0].mxu0
        %640 = vmatprep.mubr.bf16.mxu0 0
        %641 = vmatmul.mubr.bf16.gmra.mrb[0].mxu0 %v551
        %v642 = vpop.f32.mrb[0].mxu0
        %v643 = vadd.f32 0.0, %v642
        %v644 = vpop.f32.mrb[0].mxu0
        %v645 = vpop.f32.mrb[0].mxu0
        %v646 = vadd.f32 0.0, %v645
        %v647 = vpop.f32.mrb[0].mxu0
        %648 = vmatprep.mubr.bf16.mxu0 0
        %649 = vmatmul.mubr.bf16.gmra.mrb[0].mxu0 %v554
        %v650 = vpop.f32.mrb[0].mxu0
        %v651 = vadd.f32 0.0, %v650
        %v652 = vpop.f32.mrb[0].mxu0
        %v653 = vpop.f32.mrb[0].mxu0
        %v654 = vadd.f32 0.0, %v653
        %v655 = vpop.f32.mrb[0].mxu0
        %656 = vdwg.mxu0
        %v673 = vunpack.c.l.b16 %v237
        %v674 = vunpack.c.l.b16 %v238
        %v675 = vunpack.c.l.b16 %v246
        %v676 = vunpack.c.l.b16 %v247
        %v677 = vunpack.c.l.b16 %v255
        %v678 = vunpack.c.l.b16 %v256
        %v679 = vunpack.c.l.b16 %v264
        %v680 = vunpack.c.l.b16 %v265
        %v681 = vunpack.c.l.b16 %v273
        %v682 = vunpack.c.l.b16 %v274
        %v683 = vunpack.c.l.b16 %v282
        %v684 = vunpack.c.l.b16 %v283
        %v685 = vunpack.c.l.b16 %v291
        %v686 = vunpack.c.l.b16 %v292
        %v687 = vunpack.c.l.b16 %v300
        %v688 = vunpack.c.l.b16 %v301
        %v689 = vpack.c.b16 %v674, %v673
        %v690 = vpack.c.b16 %v676, %v675
        %v691 = vpack.c.b16 %v678, %v677
        %v692 = vpack.c.b16 %v680, %v679
        %v693 = vpack.c.b16 %v682, %v681
        %v694 = vpack.c.b16 %v684, %v683
        %v695 = vpack.c.b16 %v686, %v685
        %v696 = vpack.c.b16 %v688, %v687
        %v698 = vsel %vm531, %v689, 0
        %v701 = vsel %vm531, %v690, 0
        %v704 = vsel %vm531, %v691, 0
        %v707 = vsel %vm531, %v692, 0
        %v710 = vsel %vm531, %v693, 0
        %v713 = vsel %vm531, %v694, 0
        %v716 = vsel %vm531, %v695, 0
        %v719 = vsel %vm531, %v696, 0
        %v722 = vsel %vm556, %v309, 0
        %724 = vmatprep.subr.bf16.mxu0 0
        %725 = vmatpush1.bf16.msra.mxu0 %v722
        %726 = vmatprep.subr.bf16.mxu0 0
        %727 = vmatpush1.bf16.msra.mxu0 0
        %728 = vmatprep.subr.bf16.mxu0 0
        %729 = vmatpush1.bf16.msra.mxu0 0
        %730 = vmatprep.subr.bf16.mxu0 0
        %731 = vmatpush1.bf16.msra.mxu0 0
        %732 = vmatprep.subr.bf16.mxu0 0
        %733 = vmatpush1.bf16.msra.mxu0 0
        %734 = vmatprep.subr.bf16.mxu0 0
        %735 = vmatpush1.bf16.msra.mxu0 0
        %736 = vmatprep.subr.bf16.mxu0 0
        %737 = vmatpush1.bf16.msra.mxu0 0
        %738 = vmatprep.subr.bf16.mxu0 0
        %739 = vmatpush1.bf16.msra.mxu0 0
        %740 = vmatprep.subr.bf16.mxu0 0
        %741 = vmatpush1.bf16.msra.mxu0 0
        %742 = vmatprep.subr.bf16.mxu0 0
        %743 = vmatpush1.bf16.msra.mxu0 0
        %744 = vmatprep.subr.bf16.mxu0 0
        %745 = vmatpush1.bf16.msra.mxu0 0
        %746 = vmatprep.subr.bf16.mxu0 0
        %747 = vmatpush1.bf16.msra.mxu0 0
        %748 = vmatprep.subr.bf16.mxu0 0
        %749 = vmatpush1.bf16.msra.mxu0 0
        %750 = vmatprep.subr.bf16.mxu0 0
        %751 = vmatpush1.bf16.msra.mxu0 0
        %752 = vmatprep.subr.bf16.mxu0 0
        %753 = vmatpush1.bf16.msra.mxu0 0
        %754 = vmatprep.subr.bf16.mxu0 0
        %755 = vmatpush1.bf16.msra.mxu0 0
        %756 = vmatprep.mubr.bf16.mxu0 0
        %757 = vmatmul.mubr.bf16.gmra.mrb[0].mxu0 %v698
        %v758 = vpop.f32.mrb[0].mxu0
        %v759 = vadd.f32 %v595, %v758
        %v760 = vpop.f32.mrb[0].mxu0
        %v761 = vpop.f32.mrb[0].mxu0
        %v762 = vadd.f32 %v598, %v761
        %v763 = vpop.f32.mrb[0].mxu0
        %764 = vmatprep.mubr.bf16.mxu0 0
        %765 = vmatmul.mubr.bf16.gmra.mrb[0].mxu0 %v701
        %v766 = vpop.f32.mrb[0].mxu0
        %v767 = vadd.f32 %v603, %v766
        %v768 = vpop.f32.mrb[0].mxu0
        %v769 = vpop.f32.mrb[0].mxu0
        %v770 = vadd.f32 %v606, %v769
        %v771 = vpop.f32.mrb[0].mxu0
        %772 = vmatprep.mubr.bf16.mxu0 0
        %773 = vmatmul.mubr.bf16.gmra.mrb[0].mxu0 %v704
        %v774 = vpop.f32.mrb[0].mxu0
        %v775 = vadd.f32 %v611, %v774
        %v776 = vpop.f32.mrb[0].mxu0
        %v777 = vpop.f32.mrb[0].mxu0
        %v778 = vadd.f32 %v614, %v777
        %v779 = vpop.f32.mrb[0].mxu0
        %780 = vmatprep.mubr.bf16.mxu0 0
        %781 = vmatmul.mubr.bf16.gmra.mrb[0].mxu0 %v707
        %v782 = vpop.f32.mrb[0].mxu0
        %v783 = vadd.f32 %v619, %v782
        %v784 = vpop.f32.mrb[0].mxu0
        %v785 = vpop.f32.mrb[0].mxu0
        %v786 = vadd.f32 %v622, %v785
        %v787 = vpop.f32.mrb[0].mxu0
        %788 = vmatprep.mubr.bf16.mxu0 0
        %789 = vmatmul.mubr.bf16.gmra.mrb[0].mxu0 %v710
        %v790 = vpop.f32.mrb[0].mxu0
        %v791 = vadd.f32 %v627, %v790
        %v792 = vpop.f32.mrb[0].mxu0
        %v793 = vpop.f32.mrb[0].mxu0
        %v794 = vadd.f32 %v630, %v793
        %v795 = vpop.f32.mrb[0].mxu0
        %796 = vmatprep.mubr.bf16.mxu0 0
        %797 = vmatmul.mubr.bf16.gmra.mrb[0].mxu0 %v713
        %v798 = vpop.f32.mrb[0].mxu0
        %v799 = vadd.f32 %v635, %v798
        %v800 = vpop.f32.mrb[0].mxu0
        %v801 = vpop.f32.mrb[0].mxu0
        %v802 = vadd.f32 %v638, %v801
        %v803 = vpop.f32.mrb[0].mxu0
        %804 = vmatprep.mubr.bf16.mxu0 0
        %805 = vmatmul.mubr.bf16.gmra.mrb[0].mxu0 %v716
        %v806 = vpop.f32.mrb[0].mxu0
        %v807 = vadd.f32 %v643, %v806
        %v808 = vpop.f32.mrb[0].mxu0
        %v809 = vpop.f32.mrb[0].mxu0
        %v810 = vadd.f32 %v646, %v809
        %v811 = vpop.f32.mrb[0].mxu0
        %812 = vmatprep.mubr.bf16.mxu0 0
        %813 = vmatmul.mubr.bf16.gmra.mrb[0].mxu0 %v719
        %v814 = vpop.f32.mrb[0].mxu0
        %v815 = vadd.f32 %v651, %v814
        %v816 = vpop.f32.mrb[0].mxu0
        %v817 = vpop.f32.mrb[0].mxu0
        %v818 = vadd.f32 %v654, %v817
        %v819 = vpop.f32.mrb[0].mxu0
        %820 = vdwg.mxu0
        %vm829 = vcmask 1042432
        %vm830 = vcmask 1046532
        %vm831 = vmor %vm829, %vm830
        %v832 = vrot.slane %v237, 5
        %v833 = vrot.slane %v832, 4
        %v834 = vrot.slane %v238, 5
        %v835 = vsel %vm831, %v833, %v834
        %v836 = vrot.slane %v834, 4
        %v837 = vrot.slane %v239, 5
        %v838 = vsel %vm831, %v836, %v837
        %v839 = vrot.slane %v246, 5
        %v840 = vrot.slane %v839, 4
        %v841 = vrot.slane %v247, 5
        %v842 = vsel %vm831, %v840, %v841
        %v843 = vrot.slane %v841, 4
        %v844 = vrot.slane %v248, 5
        %v845 = vsel %vm831, %v843, %v844
        %v846 = vrot.slane %v255, 5
        %v847 = vrot.slane %v846, 4
        %v848 = vrot.slane %v256, 5
        %v849 = vsel %vm831, %v847, %v848
        %v850 = vrot.slane %v848, 4
        %v851 = vrot.slane %v257, 5
        %v852 = vsel %vm831, %v850, %v851
        %v853 = vrot.slane %v264, 5
        %v854 = vrot.slane %v853, 4
        %v855 = vrot.slane %v265, 5
        %v856 = vsel %vm831, %v854, %v855
        %v857 = vrot.slane %v855, 4
        %v858 = vrot.slane %v266, 5
        %v859 = vsel %vm831, %v857, %v858
        %v860 = vrot.slane %v273, 5
        %v861 = vrot.slane %v860, 4
        %v862 = vrot.slane %v274, 5
        %v863 = vsel %vm831, %v861, %v862
        %v864 = vrot.slane %v862, 4
        %v865 = vrot.slane %v275, 5
        %v866 = vsel %vm831, %v864, %v865
        %v867 = vrot.slane %v282, 5
        %v868 = vrot.slane %v867, 4
        %v869 = vrot.slane %v283, 5
        %v870 = vsel %vm831, %v868, %v869
        %v871 = vrot.slane %v869, 4
        %v872 = vrot.slane %v284, 5
        %v873 = vsel %vm831, %v871, %v872
        %v874 = vrot.slane %v291, 5
        %v875 = vrot.slane %v874, 4
        %v876 = vrot.slane %v292, 5
        %v877 = vsel %vm831, %v875, %v876
        %v878 = vrot.slane %v876, 4
        %v879 = vrot.slane %v293, 5
        %v880 = vsel %vm831, %v878, %v879
        %v881 = vrot.slane %v300, 5
        %v882 = vrot.slane %v881, 4
        %v883 = vrot.slane %v301, 5
        %v884 = vsel %vm831, %v882, %v883
        %v885 = vrot.slane %v883, 4
        %v886 = vrot.slane %v302, 5
        %v887 = vsel %vm831, %v885, %v886
        %s888 = scalar_lea.vmem [#allocation5], 8
        %v889 = vld [vmem:[%s888] sm:$0xf]
        %v890 = vunpack.c.l.b16 %v835
        %v891 = vunpack.c.l.b16 %v838
        %v892 = vunpack.c.l.b16 %v842
        %v893 = vunpack.c.l.b16 %v845
        %v894 = vunpack.c.l.b16 %v849
        %v895 = vunpack.c.l.b16 %v852
        %v896 = vunpack.c.l.b16 %v856
        %v897 = vunpack.c.l.b16 %v859
        %v898 = vunpack.c.l.b16 %v863
        %v899 = vunpack.c.l.b16 %v866
        %v900 = vunpack.c.l.b16 %v870
        %v901 = vunpack.c.l.b16 %v873
        %v902 = vunpack.c.l.b16 %v877
        %v903 = vunpack.c.l.b16 %v880
        %v904 = vunpack.c.l.b16 %v884
        %v905 = vunpack.c.l.b16 %v887
        %v906 = vpack.c.b16 %v891, %v890
        %v907 = vpack.c.b16 %v893, %v892
        %v908 = vpack.c.b16 %v895, %v894
        %v909 = vpack.c.b16 %v897, %v896
        %v910 = vpack.c.b16 %v899, %v898
        %v911 = vpack.c.b16 %v901, %v900
        %v912 = vpack.c.b16 %v903, %v902
        %v913 = vpack.c.b16 %v905, %v904
        %v915 = vsel %vm531, %v906, 0
        %v918 = vsel %vm531, %v907, 0
        %v921 = vsel %vm531, %v908, 0
        %v924 = vsel %vm531, %v909, 0
        %v927 = vsel %vm531, %v910, 0
        %v930 = vsel %vm531, %v911, 0
        %v933 = vsel %vm531, %v912, 0
        %v936 = vsel %vm531, %v913, 0
        %v939 = vsel %vm556, %v889, 0
        %941 = vmatprep.subr.bf16.mxu0 0
        %942 = vmatpush1.bf16.msra.mxu0 %v939
        %943 = vmatprep.subr.bf16.mxu0 0
        %944 = vmatpush1.bf16.msra.mxu0 0
        %945 = vmatprep.subr.bf16.mxu0 0
        %946 = vmatpush1.bf16.msra.mxu0 0
        %947 = vmatprep.subr.bf16.mxu0 0
        %948 = vmatpush1.bf16.msra.mxu0 0
        %949 = vmatprep.subr.bf16.mxu0 0
        %950 = vmatpush1.bf16.msra.mxu0 0
        %951 = vmatprep.subr.bf16.mxu0 0
        %952 = vmatpush1.bf16.msra.mxu0 0
        %953 = vmatprep.subr.bf16.mxu0 0
        %954 = vmatpush1.bf16.msra.mxu0 0
        %955 = vmatprep.subr.bf16.mxu0 0
        %956 = vmatpush1.bf16.msra.mxu0 0
        %957 = vmatprep.subr.bf16.mxu0 0
        %958 = vmatpush1.bf16.msra.mxu0 0
        %959 = vmatprep.subr.bf16.mxu0 0
        %960 = vmatpush1.bf16.msra.mxu0 0
        %961 = vmatprep.subr.bf16.mxu0 0
        %962 = vmatpush1.bf16.msra.mxu0 0
        %963 = vmatprep.subr.bf16.mxu0 0
        %964 = vmatpush1.bf16.msra.mxu0 0
        %965 = vmatprep.subr.bf16.mxu0 0
        %966 = vmatpush1.bf16.msra.mxu0 0
        %967 = vmatprep.subr.bf16.mxu0 0
        %968 = vmatpush1.bf16.msra.mxu0 0
        %969 = vmatprep.subr.bf16.mxu0 0
        %970 = vmatpush1.bf16.msra.mxu0 0
        %971 = vmatprep.subr.bf16.mxu0 0
        %972 = vmatpush1.bf16.msra.mxu0 0
        %973 = vmatprep.mubr.bf16.mxu0 0
        %974 = vmatmul.mubr.bf16.gmra.mrb[0].mxu0 %v915
        %v975 = vpop.f32.mrb[0].mxu0
        %v976 = vadd.f32 0.0, %v975
        %v977 = vpop.f32.mrb[0].mxu0
        %v978 = vpop.f32.mrb[0].mxu0
        %v979 = vadd.f32 0.0, %v978
        %v980 = vpop.f32.mrb[0].mxu0
        %981 = vmatprep.mubr.bf16.mxu0 0
        %982 = vmatmul.mubr.bf16.gmra.mrb[0].mxu0 %v918
        %v983 = vpop.f32.mrb[0].mxu0
        %v984 = vadd.f32 0.0, %v983
        %v985 = vpop.f32.mrb[0].mxu0
        %v986 = vpop.f32.mrb[0].mxu0
        %v987 = vadd.f32 0.0, %v986
        %v988 = vpop.f32.mrb[0].mxu0
        %989 = vmatprep.mubr.bf16.mxu0 0
        %990 = vmatmul.mubr.bf16.gmra.mrb[0].mxu0 %v921
        %v991 = vpop.f32.mrb[0].mxu0
        %v992 = vadd.f32 0.0, %v991
        %v993 = vpop.f32.mrb[0].mxu0
        %v994 = vpop.f32.mrb[0].mxu0
        %v995 = vadd.f32 0.0, %v994
        %v996 = vpop.f32.mrb[0].mxu0
        %997 = vmatprep.mubr.bf16.mxu0 0
        %998 = vmatmul.mubr.bf16.gmra.mrb[0].mxu0 %v924
        %v999 = vpop.f32.mrb[0].mxu0
        %v1000 = vadd.f32 0.0, %v999
        %v1001 = vpop.f32.mrb[0].mxu0
        %v1002 = vpop.f32.mrb[0].mxu0
        %v1003 = vadd.f32 0.0, %v1002
        %v1004 = vpop.f32.mrb[0].mxu0
        %1005 = vmatprep.mubr.bf16.mxu0 0
        %1006 = vmatmul.mubr.bf16.gmra.mrb[0].mxu0 %v927
        %v1007 = vpop.f32.mrb[0].mxu0
        %v1008 = vadd.f32 0.0, %v1007
        %v1009 = vpop.f32.mrb[0].mxu0
        %v1010 = vpop.f32.mrb[0].mxu0
        %v1011 = vadd.f32 0.0, %v1010
        %v1012 = vpop.f32.mrb[0].mxu0
        %1013 = vmatprep.mubr.bf16.mxu0 0
        %1014 = vmatmul.mubr.bf16.gmra.mrb[0].mxu0 %v930
        %v1015 = vpop.f32.mrb[0].mxu0
        %v1016 = vadd.f32 0.0, %v1015
        %v1017 = vpop.f32.mrb[0].mxu0
        %v1018 = vpop.f32.mrb[0].mxu0
        %v1019 = vadd.f32 0.0, %v1018
        %v1020 = vpop.f32.mrb[0].mxu0
        %1021 = vmatprep.mubr.bf16.mxu0 0
        %1022 = vmatmul.mubr.bf16.gmra.mrb[0].mxu0 %v933
        %v1023 = vpop.f32.mrb[0].mxu0
        %v1024 = vadd.f32 0.0, %v1023
        %v1025 = vpop.f32.mrb[0].mxu0
        %v1026 = vpop.f32.mrb[0].mxu0
        %v1027 = vadd.f32 0.0, %v1026
        %v1028 = vpop.f32.mrb[0].mxu0
        %1029 = vmatprep.mubr.bf16.mxu0 0
        %1030 = vmatmul.mubr.bf16.gmra.mrb[0].mxu0 %v936
        %v1031 = vpop.f32.mrb[0].mxu0
        %v1032 = vadd.f32 0.0, %v1031
        %v1033 = vpop.f32.mrb[0].mxu0
        %v1034 = vpop.f32.mrb[0].mxu0
        %v1035 = vadd.f32 0.0, %v1034
        %v1036 = vpop.f32.mrb[0].mxu0
        %1037 = vdwg.mxu0
        %v1038 = vadd.f32 %v759, %v976
        %v1039 = vadd.f32 %v762, %v979
        %v1040 = vadd.f32 %v767, %v984
        %v1041 = vadd.f32 %v770, %v987
        %v1042 = vadd.f32 %v775, %v992
        %v1043 = vadd.f32 %v778, %v995
        %v1044 = vadd.f32 %v783, %v1000
        %v1045 = vadd.f32 %v786, %v1003
        %v1046 = vadd.f32 %v791, %v1008
        %v1047 = vadd.f32 %v794, %v1011
        %v1048 = vadd.f32 %v799, %v1016
        %v1049 = vadd.f32 %v802, %v1019
        %v1050 = vadd.f32 %v807, %v1024
        %v1051 = vadd.f32 %v810, %v1027
        %v1052 = vadd.f32 %v815, %v1032
        %v1053 = vadd.f32 %v818, %v1035
        %s1054 = scalar_lea.vmem [#allocation5], 12
        %v1055 = vld [vmem:[%s1054] sm:$0xf]
        %v1072 = vunpack.c.l.b16 %v240
        %v1073 = vunpack.c.l.b16 %v241
        %v1074 = vunpack.c.l.b16 %v249
        %v1075 = vunpack.c.l.b16 %v250
        %v1076 = vunpack.c.l.b16 %v258
        %v1077 = vunpack.c.l.b16 %v259
        %v1078 = vunpack.c.l.b16 %v267
        %v1079 = vunpack.c.l.b16 %v268
        %v1080 = vunpack.c.l.b16 %v276
        %v1081 = vunpack.c.l.b16 %v277
        %v1082 = vunpack.c.l.b16 %v285
        %v1083 = vunpack.c.l.b16 %v286
        %v1084 = vunpack.c.l.b16 %v294
        %v1085 = vunpack.c.l.b16 %v295
        %v1086 = vunpack.c.l.b16 %v303
        %v1087 = vunpack.c.l.b16 %v304
        %v1088 = vpack.c.b16 %v1073, %v1072
        %v1089 = vpack.c.b16 %v1075, %v1074
        %v1090 = vpack.c.b16 %v1077, %v1076
        %v1091 = vpack.c.b16 %v1079, %v1078
        %v1092 = vpack.c.b16 %v1081, %v1080
        %v1093 = vpack.c.b16 %v1083, %v1082
        %v1094 = vpack.c.b16 %v1085, %v1084
        %v1095 = vpack.c.b16 %v1087, %v1086
        %v1097 = vsel %vm531, %v1088, 0
        %v1100 = vsel %vm531, %v1089, 0
        %v1103 = vsel %vm531, %v1090, 0
        %v1106 = vsel %vm531, %v1091, 0
        %v1109 = vsel %vm531, %v1092, 0
        %v1112 = vsel %vm531, %v1093, 0
        %v1115 = vsel %vm531, %v1094, 0
        %v1118 = vsel %vm531, %v1095, 0
        %v1121 = vsel %vm556, %v1055, 0
        %1123 = vmatprep.subr.bf16.mxu0 0
        %1124 = vmatpush1.bf16.msra.mxu0 %v1121
        %1125 = vmatprep.subr.bf16.mxu0 0
        %1126 = vmatpush1.bf16.msra.mxu0 0
        %1127 = vmatprep.subr.bf16.mxu0 0
        %1128 = vmatpush1.bf16.msra.mxu0 0
        %1129 = vmatprep.subr.bf16.mxu0 0
        %1130 = vmatpush1.bf16.msra.mxu0 0
        %1131 = vmatprep.subr.bf16.mxu0 0
        %1132 = vmatpush1.bf16.msra.mxu0 0
        %1133 = vmatprep.subr.bf16.mxu0 0
        %1134 = vmatpush1.bf16.msra.mxu0 0
        %1135 = vmatprep.subr.bf16.mxu0 0
        %1136 = vmatpush1.bf16.msra.mxu0 0
        %1137 = vmatprep.subr.bf16.mxu0 0
        %1138 = vmatpush1.bf16.msra.mxu0 0
        %1139 = vmatprep.subr.bf16.mxu0 0
        %1140 = vmatpush1.bf16.msra.mxu0 0
        %1141 = vmatprep.subr.bf16.mxu0 0
        %1142 = vmatpush1.bf16.msra.mxu0 0
        %1143 = vmatprep.subr.bf16.mxu0 0
        %1144 = vmatpush1.bf16.msra.mxu0 0
        %1145 = vmatprep.subr.bf16.mxu0 0
        %1146 = vmatpush1.bf16.msra.mxu0 0
        %1147 = vmatprep.subr.bf16.mxu0 0
        %1148 = vmatpush1.bf16.msra.mxu0 0
        %1149 = vmatprep.subr.bf16.mxu0 0
        %1150 = vmatpush1.bf16.msra.mxu0 0
        %1151 = vmatprep.subr.bf16.mxu0 0
        %1152 = vmatpush1.bf16.msra.mxu0 0
        %1153 = vmatprep.subr.bf16.mxu0 0
        %1154 = vmatpush1.bf16.msra.mxu0 0
        %1155 = vmatprep.mubr.bf16.mxu0 0
        %1156 = vmatmul.mubr.bf16.gmra.mrb[0].mxu0 %v1097
        %v1157 = vpop.f32.mrb[0].mxu0
        %v1158 = vadd.f32 0.0, %v1157
        %v1159 = vpop.f32.mrb[0].mxu0
        %v1160 = vpop.f32.mrb[0].mxu0
        %v1161 = vadd.f32 0.0, %v1160
        %v1162 = vpop.f32.mrb[0].mxu0
        %1163 = vmatprep.mubr.bf16.mxu0 0
        %1164 = vmatmul.mubr.bf16.gmra.mrb[0].mxu0 %v1100
        %v1165 = vpop.f32.mrb[0].mxu0
        %v1166 = vadd.f32 0.0, %v1165
        %v1167 = vpop.f32.mrb[0].mxu0
        %v1168 = vpop.f32.mrb[0].mxu0
        %v1169 = vadd.f32 0.0, %v1168
        %v1170 = vpop.f32.mrb[0].mxu0
        %1171 = vmatprep.mubr.bf16.mxu0 0
        %1172 = vmatmul.mubr.bf16.gmra.mrb[0].mxu0 %v1103
        %v1173 = vpop.f32.mrb[0].mxu0
        %v1174 = vadd.f32 0.0, %v1173
        %v1175 = vpop.f32.mrb[0].mxu0
        %v1176 = vpop.f32.mrb[0].mxu0
        %v1177 = vadd.f32 0.0, %v1176
        %v1178 = vpop.f32.mrb[0].mxu0
        %1179 = vmatprep.mubr.bf16.mxu0 0
        %1180 = vmatmul.mubr.bf16.gmra.mrb[0].mxu0 %v1106
        %v1181 = vpop.f32.mrb[0].mxu0
        %v1182 = vadd.f32 0.0, %v1181
        %v1183 = vpop.f32.mrb[0].mxu0
        %v1184 = vpop.f32.mrb[0].mxu0
        %v1185 = vadd.f32 0.0, %v1184
        %v1186 = vpop.f32.mrb[0].mxu0
        %1187 = vmatprep.mubr.bf16.mxu0 0
        %1188 = vmatmul.mubr.bf16.gmra.mrb[0].mxu0 %v1109
        %v1189 = vpop.f32.mrb[0].mxu0
        %v1190 = vadd.f32 0.0, %v1189
        %v1191 = vpop.f32.mrb[0].mxu0
        %v1192 = vpop.f32.mrb[0].mxu0
        %v1193 = vadd.f32 0.0, %v1192
        %v1194 = vpop.f32.mrb[0].mxu0
        %1195 = vmatprep.mubr.bf16.mxu0 0
        %1196 = vmatmul.mubr.bf16.gmra.mrb[0].mxu0 %v1112
        %v1197 = vpop.f32.mrb[0].mxu0
        %v1198 = vadd.f32 0.0, %v1197
        %v1199 = vpop.f32.mrb[0].mxu0
        %v1200 = vpop.f32.mrb[0].mxu0
        %v1201 = vadd.f32 0.0, %v1200
        %v1202 = vpop.f32.mrb[0].mxu0
        %1203 = vmatprep.mubr.bf16.mxu0 0
        %1204 = vmatmul.mubr.bf16.gmra.mrb[0].mxu0 %v1115
        %v1205 = vpop.f32.mrb[0].mxu0
        %v1206 = vadd.f32 0.0, %v1205
        %v1207 = vpop.f32.mrb[0].mxu0
        %v1208 = vpop.f32.mrb[0].mxu0
        %v1209 = vadd.f32 0.0, %v1208
        %v1210 = vpop.f32.mrb[0].mxu0
        %1211 = vmatprep.mubr.bf16.mxu0 0
        %1212 = vmatmul.mubr.bf16.gmra.mrb[0].mxu0 %v1118
        %v1213 = vpop.f32.mrb[0].mxu0
        %v1214 = vadd.f32 0.0, %v1213
        %v1215 = vpop.f32.mrb[0].mxu0
        %v1216 = vpop.f32.mrb[0].mxu0
        %v1217 = vadd.f32 0.0, %v1216
        %v1218 = vpop.f32.mrb[0].mxu0
        %1219 = vdwg.mxu0
        %v1220 = vadd.f32 %v1038, %v1158
        %v1221 = vadd.f32 %v1039, %v1161
        %v1222 = vadd.f32 %v1040, %v1166
        %v1223 = vadd.f32 %v1041, %v1169
        %v1224 = vadd.f32 %v1042, %v1174
        %v1225 = vadd.f32 %v1043, %v1177
        %v1226 = vadd.f32 %v1044, %v1182
        %v1227 = vadd.f32 %v1045, %v1185
        %v1228 = vadd.f32 %v1046, %v1190
        %v1229 = vadd.f32 %v1047, %v1193
        %v1230 = vadd.f32 %v1048, %v1198
        %v1231 = vadd.f32 %v1049, %v1201
        %v1232 = vadd.f32 %v1050, %v1206
        %v1233 = vadd.f32 %v1051, %v1209
        %v1234 = vadd.f32 %v1052, %v1214
        %v1235 = vadd.f32 %v1053, %v1217
        %v1237 = vshrl.u32 %v240, 16
        %v1239 = vrot.slane %v1237, 4
        %v1240 = vshll.u32 %v240, 16
        %v1242 = vrot.slane %v1240, 5
        %v1243 = vor.u32 %v1239, %v1242
        %v1244 = vrot.slane %v1243, 4
        %v1246 = vshll.u32 %v241, 16
        %v1248 = vrot.slane %v1246, 5
        %v1249 = vsel %vm312, %v1244, %v1248
        %v1250 = vshrl.u32 %v241, 16
        %v1252 = vrot.slane %v1250, 4
        %v1253 = vor.u32 %v1252, %v1248
        %v1254 = vrot.slane %v1253, 4
        %v1256 = vshll.u32 %v242, 16
        %v1258 = vrot.slane %v1256, 5
        %v1259 = vsel %vm312, %v1254, %v1258
        %v1261 = vshrl.u32 %v249, 16
        %v1263 = vrot.slane %v1261, 4
        %v1264 = vshll.u32 %v249, 16
        %v1266 = vrot.slane %v1264, 5
        %v1267 = vor.u32 %v1263, %v1266
        %v1268 = vrot.slane %v1267, 4
        %v1270 = vshll.u32 %v250, 16
        %v1272 = vrot.slane %v1270, 5
        %v1273 = vsel %vm312, %v1268, %v1272
        %v1274 = vshrl.u32 %v250, 16
        %v1276 = vrot.slane %v1274, 4
        %v1277 = vor.u32 %v1276, %v1272
        %v1278 = vrot.slane %v1277, 4
        %v1280 = vshll.u32 %v251, 16
        %v1282 = vrot.slane %v1280, 5
        %v1283 = vsel %vm312, %v1278, %v1282
        %v1285 = vshrl.u32 %v258, 16
        %v1287 = vrot.slane %v1285, 4
        %v1288 = vshll.u32 %v258, 16
        %v1290 = vrot.slane %v1288, 5
        %v1291 = vor.u32 %v1287, %v1290
        %v1292 = vrot.slane %v1291, 4
        %v1294 = vshll.u32 %v259, 16
        %v1296 = vrot.slane %v1294, 5
        %v1297 = vsel %vm312, %v1292, %v1296
        %v1298 = vshrl.u32 %v259, 16
        %v1300 = vrot.slane %v1298, 4
        %v1301 = vor.u32 %v1300, %v1296
        %v1302 = vrot.slane %v1301, 4
        %v1304 = vshll.u32 %v260, 16
        %v1306 = vrot.slane %v1304, 5
        %v1307 = vsel %vm312, %v1302, %v1306
        %v1309 = vshrl.u32 %v267, 16
        %v1311 = vrot.slane %v1309, 4
        %v1312 = vshll.u32 %v267, 16
        %v1314 = vrot.slane %v1312, 5
        %v1315 = vor.u32 %v1311, %v1314
        %v1316 = vrot.slane %v1315, 4
        %v1318 = vshll.u32 %v268, 16
        %v1320 = vrot.slane %v1318, 5
        %v1321 = vsel %vm312, %v1316, %v1320
        %v1322 = vshrl.u32 %v268, 16
        %v1324 = vrot.slane %v1322, 4
        %v1325 = vor.u32 %v1324, %v1320
        %v1326 = vrot.slane %v1325, 4
        %v1328 = vshll.u32 %v269, 16
        %v1330 = vrot.slane %v1328, 5
        %v1331 = vsel %vm312, %v1326, %v1330
        %v1333 = vshrl.u32 %v276, 16
        %v1335 = vrot.slane %v1333, 4
        %v1336 = vshll.u32 %v276, 16
        %v1338 = vrot.slane %v1336, 5
        %v1339 = vor.u32 %v1335, %v1338
        %v1340 = vrot.slane %v1339, 4
        %v1342 = vshll.u32 %v277, 16
        %v1344 = vrot.slane %v1342, 5
        %v1345 = vsel %vm312, %v1340, %v1344
        %v1346 = vshrl.u32 %v277, 16
        %v1348 = vrot.slane %v1346, 4
        %v1349 = vor.u32 %v1348, %v1344
        %v1350 = vrot.slane %v1349, 4
        %v1352 = vshll.u32 %v278, 16
        %v1354 = vrot.slane %v1352, 5
        %v1355 = vsel %vm312, %v1350, %v1354
        %v1357 = vshrl.u32 %v285, 16
        %v1359 = vrot.slane %v1357, 4
        %v1360 = vshll.u32 %v285, 16
        %v1362 = vrot.slane %v1360, 5
        %v1363 = vor.u32 %v1359, %v1362
        %v1364 = vrot.slane %v1363, 4
        %v1366 = vshll.u32 %v286, 16
        %v1368 = vrot.slane %v1366, 5
        %v1369 = vsel %vm312, %v1364, %v1368
        %v1370 = vshrl.u32 %v286, 16
        %v1372 = vrot.slane %v1370, 4
        %v1373 = vor.u32 %v1372, %v1368
        %v1374 = vrot.slane %v1373, 4
        %v1376 = vshll.u32 %v287, 16
        %v1378 = vrot.slane %v1376, 5
        %v1379 = vsel %vm312, %v1374, %v1378
        %v1381 = vshrl.u32 %v294, 16
        %v1383 = vrot.slane %v1381, 4
        %v1384 = vshll.u32 %v294, 16
        %v1386 = vrot.slane %v1384, 5
        %v1387 = vor.u32 %v1383, %v1386
        %v1388 = vrot.slane %v1387, 4
        %v1390 = vshll.u32 %v295, 16
        %v1392 = vrot.slane %v1390, 5
        %v1393 = vsel %vm312, %v1388, %v1392
        %v1394 = vshrl.u32 %v295, 16
        %v1396 = vrot.slane %v1394, 4
        %v1397 = vor.u32 %v1396, %v1392
        %v1398 = vrot.slane %v1397, 4
        %v1400 = vshll.u32 %v296, 16
        %v1402 = vrot.slane %v1400, 5
        %v1403 = vsel %vm312, %v1398, %v1402
        %v1405 = vshrl.u32 %v303, 16
        %v1407 = vrot.slane %v1405, 4
        %v1408 = vshll.u32 %v303, 16
        %v1410 = vrot.slane %v1408, 5
        %v1411 = vor.u32 %v1407, %v1410
        %v1412 = vrot.slane %v1411, 4
        %v1414 = vshll.u32 %v304, 16
        %v1416 = vrot.slane %v1414, 5
        %v1417 = vsel %vm312, %v1412, %v1416
        %v1418 = vshrl.u32 %v304, 16
        %v1420 = vrot.slane %v1418, 4
        %v1421 = vor.u32 %v1420, %v1416
        %v1422 = vrot.slane %v1421, 4
        %v1424 = vshll.u32 %v305, 16
        %v1426 = vrot.slane %v1424, 5
        %v1427 = vsel %vm312, %v1422, %v1426
        %s1428 = scalar_lea.vmem [#allocation5], 16
        %v1429 = vld [vmem:[%s1428] sm:$0xf]
        %v1430 = vunpack.c.l.b16 %v1249
        %v1431 = vunpack.c.l.b16 %v1259
        %v1432 = vunpack.c.l.b16 %v1273
        %v1433 = vunpack.c.l.b16 %v1283
        %v1434 = vunpack.c.l.b16 %v1297
        %v1435 = vunpack.c.l.b16 %v1307
        %v1436 = vunpack.c.l.b16 %v1321
        %v1437 = vunpack.c.l.b16 %v1331
        %v1438 = vunpack.c.l.b16 %v1345
        %v1439 = vunpack.c.l.b16 %v1355
        %v1440 = vunpack.c.l.b16 %v1369
        %v1441 = vunpack.c.l.b16 %v1379
        %v1442 = vunpack.c.l.b16 %v1393
        %v1443 = vunpack.c.l.b16 %v1403
        %v1444 = vunpack.c.l.b16 %v1417
        %v1445 = vunpack.c.l.b16 %v1427
        %v1446 = vpack.c.b16 %v1431, %v1430
        %v1447 = vpack.c.b16 %v1433, %v1432
        %v1448 = vpack.c.b16 %v1435, %v1434
        %v1449 = vpack.c.b16 %v1437, %v1436
        %v1450 = vpack.c.b16 %v1439, %v1438
        %v1451 = vpack.c.b16 %v1441, %v1440
        %v1452 = vpack.c.b16 %v1443, %v1442
        %v1453 = vpack.c.b16 %v1445, %v1444
        %v1455 = vsel %vm531, %v1446, 0
        %v1458 = vsel %vm531, %v1447, 0
        %v1461 = vsel %vm531, %v1448, 0
        %v1464 = vsel %vm531, %v1449, 0
        %v1467 = vsel %vm531, %v1450, 0
        %v1470 = vsel %vm531, %v1451, 0
        %v1473 = vsel %vm531, %v1452, 0
        %v1476 = vsel %vm531, %v1453, 0
        %v1479 = vsel %vm556, %v1429, 0
        %1481 = vmatprep.subr.bf16.mxu0 0
        %1482 = vmatpush1.bf16.msra.mxu0 %v1479
        %1483 = vmatprep.subr.bf16.mxu0 0
        %1484 = vmatpush1.bf16.msra.mxu0 0
        %1485 = vmatprep.subr.bf16.mxu0 0
        %1486 = vmatpush1.bf16.msra.mxu0 0
        %1487 = vmatprep.subr.bf16.mxu0 0
        %1488 = vmatpush1.bf16.msra.mxu0 0
        %1489 = vmatprep.subr.bf16.mxu0 0
        %1490 = vmatpush1.bf16.msra.mxu0 0
        %1491 = vmatprep.subr.bf16.mxu0 0
        %1492 = vmatpush1.bf16.msra.mxu0 0
        %1493 = vmatprep.subr.bf16.mxu0 0
        %1494 = vmatpush1.bf16.msra.mxu0 0
        %1495 = vmatprep.subr.bf16.mxu0 0
        %1496 = vmatpush1.bf16.msra.mxu0 0
        %1497 = vmatprep.subr.bf16.mxu0 0
        %1498 = vmatpush1.bf16.msra.mxu0 0
        %1499 = vmatprep.subr.bf16.mxu0 0
        %1500 = vmatpush1.bf16.msra.mxu0 0
        %1501 = vmatprep.subr.bf16.mxu0 0
        %1502 = vmatpush1.bf16.msra.mxu0 0
        %1503 = vmatprep.subr.bf16.mxu0 0
        %1504 = vmatpush1.bf16.msra.mxu0 0
        %1505 = vmatprep.subr.bf16.mxu0 0
        %1506 = vmatpush1.bf16.msra.mxu0 0
        %1507 = vmatprep.subr.bf16.mxu0 0
        %1508 = vmatpush1.bf16.msra.mxu0 0
        %1509 = vmatprep.subr.bf16.mxu0 0
        %1510 = vmatpush1.bf16.msra.mxu0 0
        %1511 = vmatprep.subr.bf16.mxu0 0
        %1512 = vmatpush1.bf16.msra.mxu0 0
        %1513 = vmatprep.mubr.bf16.mxu0 0
        %1514 = vmatmul.mubr.bf16.gmra.mrb[0].mxu0 %v1455
        %v1515 = vpop.f32.mrb[0].mxu0
        %v1516 = vadd.f32 0.0, %v1515
        %v1517 = vpop.f32.mrb[0].mxu0
        %v1518 = vpop.f32.mrb[0].mxu0
        %v1519 = vadd.f32 0.0, %v1518
        %v1520 = vpop.f32.mrb[0].mxu0
        %1521 = vmatprep.mubr.bf16.mxu0 0
        %1522 = vmatmul.mubr.bf16.gmra.mrb[0].mxu0 %v1458
        %v1523 = vpop.f32.mrb[0].mxu0
        %v1524 = vadd.f32 0.0, %v1523
        %v1525 = vpop.f32.mrb[0].mxu0
        %v1526 = vpop.f32.mrb[0].mxu0
        %v1527 = vadd.f32 0.0, %v1526
        %v1528 = vpop.f32.mrb[0].mxu0
        %1529 = vmatprep.mubr.bf16.mxu0 0
        %1530 = vmatmul.mubr.bf16.gmra.mrb[0].mxu0 %v1461
        %v1531 = vpop.f32.mrb[0].mxu0
        %v1532 = vadd.f32 0.0, %v1531
        %v1533 = vpop.f32.mrb[0].mxu0
        %v1534 = vpop.f32.mrb[0].mxu0
        %v1535 = vadd.f32 0.0, %v1534
        %v1536 = vpop.f32.mrb[0].mxu0
        %1537 = vmatprep.mubr.bf16.mxu0 0
        %1538 = vmatmul.mubr.bf16.gmra.mrb[0].mxu0 %v1464
        %v1539 = vpop.f32.mrb[0].mxu0
        %v1540 = vadd.f32 0.0, %v1539
        %v1541 = vpop.f32.mrb[0].mxu0
        %v1542 = vpop.f32.mrb[0].mxu0
        %v1543 = vadd.f32 0.0, %v1542
        %v1544 = vpop.f32.mrb[0].mxu0
        %1545 = vmatprep.mubr.bf16.mxu0 0
        %1546 = vmatmul.mubr.bf16.gmra.mrb[0].mxu0 %v1467
        %v1547 = vpop.f32.mrb[0].mxu0
        %v1548 = vadd.f32 0.0, %v1547
        %v1549 = vpop.f32.mrb[0].mxu0
        %v1550 = vpop.f32.mrb[0].mxu0
        %v1551 = vadd.f32 0.0, %v1550
        %v1552 = vpop.f32.mrb[0].mxu0
        %1553 = vmatprep.mubr.bf16.mxu0 0
        %1554 = vmatmul.mubr.bf16.gmra.mrb[0].mxu0 %v1470
        %v1555 = vpop.f32.mrb[0].mxu0
        %v1556 = vadd.f32 0.0, %v1555
        %v1557 = vpop.f32.mrb[0].mxu0
        %v1558 = vpop.f32.mrb[0].mxu0
        %v1559 = vadd.f32 0.0, %v1558
        %v1560 = vpop.f32.mrb[0].mxu0
        %1561 = vmatprep.mubr.bf16.mxu0 0
        %1562 = vmatmul.mubr.bf16.gmra.mrb[0].mxu0 %v1473
        %v1563 = vpop.f32.mrb[0].mxu0
        %v1564 = vadd.f32 0.0, %v1563
        %v1565 = vpop.f32.mrb[0].mxu0
        %v1566 = vpop.f32.mrb[0].mxu0
        %v1567 = vadd.f32 0.0, %v1566
        %v1568 = vpop.f32.mrb[0].mxu0
        %1569 = vmatprep.mubr.bf16.mxu0 0
        %1570 = vmatmul.mubr.bf16.gmra.mrb[0].mxu0 %v1476
        %v1571 = vpop.f32.mrb[0].mxu0
        %v1572 = vadd.f32 0.0, %v1571
        %v1573 = vpop.f32.mrb[0].mxu0
        %v1574 = vpop.f32.mrb[0].mxu0
        %v1575 = vadd.f32 0.0, %v1574
        %v1576 = vpop.f32.mrb[0].mxu0
        %1577 = vdwg.mxu0
        %v1578 = vadd.f32 %v1220, %v1516
        %v1579 = vadd.f32 %v1221, %v1519
        %v1580 = vadd.f32 %v1222, %v1524
        %v1581 = vadd.f32 %v1223, %v1527
        %v1582 = vadd.f32 %v1224, %v1532
        %v1583 = vadd.f32 %v1225, %v1535
        %v1584 = vadd.f32 %v1226, %v1540
        %v1585 = vadd.f32 %v1227, %v1543
        %v1586 = vadd.f32 %v1228, %v1548
        %v1587 = vadd.f32 %v1229, %v1551
        %v1588 = vadd.f32 %v1230, %v1556
        %v1589 = vadd.f32 %v1231, %v1559
        %v1590 = vadd.f32 %v1232, %v1564
        %v1591 = vadd.f32 %v1233, %v1567
        %v1592 = vadd.f32 %v1234, %v1572
        %v1593 = vadd.f32 %v1235, %v1575
        %v1602 = vrot.slane %v240, 5
        %v1603 = vrot.slane %v1602, 4
        %v1604 = vrot.slane %v241, 5
        %v1605 = vsel %vm831, %v1603, %v1604
        %v1606 = vrot.slane %v1604, 4
        %v1607 = vrot.slane %v242, 5
        %v1608 = vsel %vm831, %v1606, %v1607
        %v1609 = vrot.slane %v249, 5
        %v1610 = vrot.slane %v1609, 4
        %v1611 = vrot.slane %v250, 5
        %v1612 = vsel %vm831, %v1610, %v1611
        %v1613 = vrot.slane %v1611, 4
        %v1614 = vrot.slane %v251, 5
        %v1615 = vsel %vm831, %v1613, %v1614
        %v1616 = vrot.slane %v258, 5
        %v1617 = vrot.slane %v1616, 4
        %v1618 = vrot.slane %v259, 5
        %v1619 = vsel %vm831, %v1617, %v1618
        %v1620 = vrot.slane %v1618, 4
        %v1621 = vrot.slane %v260, 5
        %v1622 = vsel %vm831, %v1620, %v1621
        %v1623 = vrot.slane %v267, 5
        %v1624 = vrot.slane %v1623, 4
        %v1625 = vrot.slane %v268, 5
        %v1626 = vsel %vm831, %v1624, %v1625
        %v1627 = vrot.slane %v1625, 4
        %v1628 = vrot.slane %v269, 5
        %v1629 = vsel %vm831, %v1627, %v1628
        %v1630 = vrot.slane %v276, 5
        %v1631 = vrot.slane %v1630, 4
        %v1632 = vrot.slane %v277, 5
        %v1633 = vsel %vm831, %v1631, %v1632
        %v1634 = vrot.slane %v1632, 4
        %v1635 = vrot.slane %v278, 5
        %v1636 = vsel %vm831, %v1634, %v1635
        %v1637 = vrot.slane %v285, 5
        %v1638 = vrot.slane %v1637, 4
        %v1639 = vrot.slane %v286, 5
        %v1640 = vsel %vm831, %v1638, %v1639
        %v1641 = vrot.slane %v1639, 4
        %v1642 = vrot.slane %v287, 5
        %v1643 = vsel %vm831, %v1641, %v1642
        %v1644 = vrot.slane %v294, 5
        %v1645 = vrot.slane %v1644, 4
        %v1646 = vrot.slane %v295, 5
        %v1647 = vsel %vm831, %v1645, %v1646
        %v1648 = vrot.slane %v1646, 4
        %v1649 = vrot.slane %v296, 5
        %v1650 = vsel %vm831, %v1648, %v1649
        %v1651 = vrot.slane %v303, 5
        %v1652 = vrot.slane %v1651, 4
        %v1653 = vrot.slane %v304, 5
        %v1654 = vsel %vm831, %v1652, %v1653
        %v1655 = vrot.slane %v1653, 4
        %v1656 = vrot.slane %v305, 5
        %v1657 = vsel %vm831, %v1655, %v1656
        %s1658 = scalar_lea.vmem [#allocation5], 20
        %v1659 = vld [vmem:[%s1658] sm:$0xf]
        %v1660 = vunpack.c.l.b16 %v1605
        %v1661 = vunpack.c.l.b16 %v1608
        %v1662 = vunpack.c.l.b16 %v1612
        %v1663 = vunpack.c.l.b16 %v1615
        %v1664 = vunpack.c.l.b16 %v1619
        %v1665 = vunpack.c.l.b16 %v1622
        %v1666 = vunpack.c.l.b16 %v1626
        %v1667 = vunpack.c.l.b16 %v1629
        %v1668 = vunpack.c.l.b16 %v1633
        %v1669 = vunpack.c.l.b16 %v1636
        %v1670 = vunpack.c.l.b16 %v1640
        %v1671 = vunpack.c.l.b16 %v1643
        %v1672 = vunpack.c.l.b16 %v1647
        %v1673 = vunpack.c.l.b16 %v1650
        %v1674 = vunpack.c.l.b16 %v1654
        %v1675 = vunpack.c.l.b16 %v1657
        %v1676 = vpack.c.b16 %v1661, %v1660
        %v1677 = vpack.c.b16 %v1663, %v1662
        %v1678 = vpack.c.b16 %v1665, %v1664
        %v1679 = vpack.c.b16 %v1667, %v1666
        %v1680 = vpack.c.b16 %v1669, %v1668
        %v1681 = vpack.c.b16 %v1671, %v1670
        %v1682 = vpack.c.b16 %v1673, %v1672
        %v1683 = vpack.c.b16 %v1675, %v1674
        %v1685 = vsel %vm531, %v1676, 0
        %v1688 = vsel %vm531, %v1677, 0
        %v1691 = vsel %vm531, %v1678, 0
        %v1694 = vsel %vm531, %v1679, 0
        %v1697 = vsel %vm531, %v1680, 0
        %v1700 = vsel %vm531, %v1681, 0
        %v1703 = vsel %vm531, %v1682, 0
        %v1706 = vsel %vm531, %v1683, 0
        %v1709 = vsel %vm556, %v1659, 0
        %1711 = vmatprep.subr.bf16.mxu0 0
        %1712 = vmatpush1.bf16.msra.mxu0 %v1709
        %1713 = vmatprep.subr.bf16.mxu0 0
        %1714 = vmatpush1.bf16.msra.mxu0 0
        %1715 = vmatprep.subr.bf16.mxu0 0
        %1716 = vmatpush1.bf16.msra.mxu0 0
        %1717 = vmatprep.subr.bf16.mxu0 0
        %1718 = vmatpush1.bf16.msra.mxu0 0
        %1719 = vmatprep.subr.bf16.mxu0 0
        %1720 = vmatpush1.bf16.msra.mxu0 0
        %1721 = vmatprep.subr.bf16.mxu0 0
        %1722 = vmatpush1.bf16.msra.mxu0 0
        %1723 = vmatprep.subr.bf16.mxu0 0
        %1724 = vmatpush1.bf16.msra.mxu0 0
        %1725 = vmatprep.subr.bf16.mxu0 0
        %1726 = vmatpush1.bf16.msra.mxu0 0
        %1727 = vmatprep.subr.bf16.mxu0 0
        %1728 = vmatpush1.bf16.msra.mxu0 0
        %1729 = vmatprep.subr.bf16.mxu0 0
        %1730 = vmatpush1.bf16.msra.mxu0 0
        %1731 = vmatprep.subr.bf16.mxu0 0
        %1732 = vmatpush1.bf16.msra.mxu0 0
        %1733 = vmatprep.subr.bf16.mxu0 0
        %1734 = vmatpush1.bf16.msra.mxu0 0
        %1735 = vmatprep.subr.bf16.mxu0 0
        %1736 = vmatpush1.bf16.msra.mxu0 0
        %1737 = vmatprep.subr.bf16.mxu0 0
        %1738 = vmatpush1.bf16.msra.mxu0 0
        %1739 = vmatprep.subr.bf16.mxu0 0
        %1740 = vmatpush1.bf16.msra.mxu0 0
        %1741 = vmatprep.subr.bf16.mxu0 0
        %1742 = vmatpush1.bf16.msra.mxu0 0
        %1743 = vmatprep.mubr.bf16.mxu0 0
        %1744 = vmatmul.mubr.bf16.gmra.mrb[0].mxu0 %v1685
        %v1745 = vpop.f32.mrb[0].mxu0
        %v1746 = vadd.f32 0.0, %v1745
        %v1747 = vpop.f32.mrb[0].mxu0
        %v1748 = vpop.f32.mrb[0].mxu0
        %v1749 = vadd.f32 0.0, %v1748
        %v1750 = vpop.f32.mrb[0].mxu0
        %1751 = vmatprep.mubr.bf16.mxu0 0
        %1752 = vmatmul.mubr.bf16.gmra.mrb[0].mxu0 %v1688
        %v1753 = vpop.f32.mrb[0].mxu0
        %v1754 = vadd.f32 0.0, %v1753
        %v1755 = vpop.f32.mrb[0].mxu0
        %v1756 = vpop.f32.mrb[0].mxu0
        %v1757 = vadd.f32 0.0, %v1756
        %v1758 = vpop.f32.mrb[0].mxu0
        %1759 = vmatprep.mubr.bf16.mxu0 0
        %1760 = vmatmul.mubr.bf16.gmra.mrb[0].mxu0 %v1691
        %v1761 = vpop.f32.mrb[0].mxu0
        %v1762 = vadd.f32 0.0, %v1761
        %v1763 = vpop.f32.mrb[0].mxu0
        %v1764 = vpop.f32.mrb[0].mxu0
        %v1765 = vadd.f32 0.0, %v1764
        %v1766 = vpop.f32.mrb[0].mxu0
        %1767 = vmatprep.mubr.bf16.mxu0 0
        %1768 = vmatmul.mubr.bf16.gmra.mrb[0].mxu0 %v1694
        %v1769 = vpop.f32.mrb[0].mxu0
        %v1770 = vadd.f32 0.0, %v1769
        %v1771 = vpop.f32.mrb[0].mxu0
        %v1772 = vpop.f32.mrb[0].mxu0
        %v1773 = vadd.f32 0.0, %v1772
        %v1774 = vpop.f32.mrb[0].mxu0
        %1775 = vmatprep.mubr.bf16.mxu0 0
        %1776 = vmatmul.mubr.bf16.gmra.mrb[0].mxu0 %v1697
        %v1777 = vpop.f32.mrb[0].mxu0
        %v1778 = vadd.f32 0.0, %v1777
        %v1779 = vpop.f32.mrb[0].mxu0
        %v1780 = vpop.f32.mrb[0].mxu0
        %v1781 = vadd.f32 0.0, %v1780
        %v1782 = vpop.f32.mrb[0].mxu0
        %1783 = vmatprep.mubr.bf16.mxu0 0
        %1784 = vmatmul.mubr.bf16.gmra.mrb[0].mxu0 %v1700
        %v1785 = vpop.f32.mrb[0].mxu0
        %v1786 = vadd.f32 0.0, %v1785
        %v1787 = vpop.f32.mrb[0].mxu0
        %v1788 = vpop.f32.mrb[0].mxu0
        %v1789 = vadd.f32 0.0, %v1788
        %v1790 = vpop.f32.mrb[0].mxu0
        %1791 = vmatprep.mubr.bf16.mxu0 0
        %1792 = vmatmul.mubr.bf16.gmra.mrb[0].mxu0 %v1703
        %v1793 = vpop.f32.mrb[0].mxu0
        %v1794 = vadd.f32 0.0, %v1793
        %v1795 = vpop.f32.mrb[0].mxu0
        %v1796 = vpop.f32.mrb[0].mxu0
        %v1797 = vadd.f32 0.0, %v1796
        %v1798 = vpop.f32.mrb[0].mxu0
        %1799 = vmatprep.mubr.bf16.mxu0 0
        %1800 = vmatmul.mubr.bf16.gmra.mrb[0].mxu0 %v1706
        %v1801 = vpop.f32.mrb[0].mxu0
        %v1802 = vadd.f32 0.0, %v1801
        %v1803 = vpop.f32.mrb[0].mxu0
        %v1804 = vpop.f32.mrb[0].mxu0
        %v1805 = vadd.f32 0.0, %v1804
        %v1806 = vpop.f32.mrb[0].mxu0
        %1807 = vdwg.mxu0
        %v1808 = vadd.f32 %v1578, %v1746
        %v1809 = vadd.f32 %v1579, %v1749
        %v1810 = vadd.f32 %v1580, %v1754
        %v1811 = vadd.f32 %v1581, %v1757
        %v1812 = vadd.f32 %v1582, %v1762
        %v1813 = vadd.f32 %v1583, %v1765
        %v1814 = vadd.f32 %v1584, %v1770
        %v1815 = vadd.f32 %v1585, %v1773
        %v1816 = vadd.f32 %v1586, %v1778
        %v1817 = vadd.f32 %v1587, %v1781
        %v1818 = vadd.f32 %v1588, %v1786
        %v1819 = vadd.f32 %v1589, %v1789
        %v1820 = vadd.f32 %v1590, %v1794
        %v1821 = vadd.f32 %v1591, %v1797
        %v1822 = vadd.f32 %v1592, %v1802
        %v1823 = vadd.f32 %v1593, %v1805
        %s1824 = scalar_lea.vmem [#allocation5], 24
        %v1825 = vld [vmem:[%s1824] sm:$0xf]
        %v1842 = vunpack.c.l.b16 %v243
        %v1843 = vunpack.c.l.b16 %v244
        %v1844 = vunpack.c.l.b16 %v252
        %v1845 = vunpack.c.l.b16 %v253
        %v1846 = vunpack.c.l.b16 %v261
        %v1847 = vunpack.c.l.b16 %v262
        %v1848 = vunpack.c.l.b16 %v270
        %v1849 = vunpack.c.l.b16 %v271
        %v1850 = vunpack.c.l.b16 %v279
        %v1851 = vunpack.c.l.b16 %v280
        %v1852 = vunpack.c.l.b16 %v288
        %v1853 = vunpack.c.l.b16 %v289
        %v1854 = vunpack.c.l.b16 %v297
        %v1855 = vunpack.c.l.b16 %v298
        %v1856 = vunpack.c.l.b16 %v306
        %v1857 = vunpack.c.l.b16 %v307
        %v1858 = vpack.c.b16 %v1843, %v1842
        %v1859 = vpack.c.b16 %v1845, %v1844
        %v1860 = vpack.c.b16 %v1847, %v1846
        %v1861 = vpack.c.b16 %v1849, %v1848
        %v1862 = vpack.c.b16 %v1851, %v1850
        %v1863 = vpack.c.b16 %v1853, %v1852
        %v1864 = vpack.c.b16 %v1855, %v1854
        %v1865 = vpack.c.b16 %v1857, %v1856
        %v1867 = vsel %vm531, %v1858, 0
        %v1870 = vsel %vm531, %v1859, 0
        %v1873 = vsel %vm531, %v1860, 0
        %v1876 = vsel %vm531, %v1861, 0
        %v1879 = vsel %vm531, %v1862, 0
        %v1882 = vsel %vm531, %v1863, 0
        %v1885 = vsel %vm531, %v1864, 0
        %v1888 = vsel %vm531, %v1865, 0
        %v1891 = vsel %vm556, %v1825, 0
        %1893 = vmatprep.subr.bf16.mxu0 0
        %1894 = vmatpush1.bf16.msra.mxu0 %v1891
        %1895 = vmatprep.subr.bf16.mxu0 0
        %1896 = vmatpush1.bf16.msra.mxu0 0
        %1897 = vmatprep.subr.bf16.mxu0 0
        %1898 = vmatpush1.bf16.msra.mxu0 0
        %1899 = vmatprep.subr.bf16.mxu0 0
        %1900 = vmatpush1.bf16.msra.mxu0 0
        %1901 = vmatprep.subr.bf16.mxu0 0
        %1902 = vmatpush1.bf16.msra.mxu0 0
        %1903 = vmatprep.subr.bf16.mxu0 0
        %1904 = vmatpush1.bf16.msra.mxu0 0
        %1905 = vmatprep.subr.bf16.mxu0 0
        %1906 = vmatpush1.bf16.msra.mxu0 0
        %1907 = vmatprep.subr.bf16.mxu0 0
        %1908 = vmatpush1.bf16.msra.mxu0 0
        %1909 = vmatprep.subr.bf16.mxu0 0
        %1910 = vmatpush1.bf16.msra.mxu0 0
        %1911 = vmatprep.subr.bf16.mxu0 0
        %1912 = vmatpush1.bf16.msra.mxu0 0
        %1913 = vmatprep.subr.bf16.mxu0 0
        %1914 = vmatpush1.bf16.msra.mxu0 0
        %1915 = vmatprep.subr.bf16.mxu0 0
        %1916 = vmatpush1.bf16.msra.mxu0 0
        %1917 = vmatprep.subr.bf16.mxu0 0
        %1918 = vmatpush1.bf16.msra.mxu0 0
        %1919 = vmatprep.subr.bf16.mxu0 0
        %1920 = vmatpush1.bf16.msra.mxu0 0
        %1921 = vmatprep.subr.bf16.mxu0 0
        %1922 = vmatpush1.bf16.msra.mxu0 0
        %1923 = vmatprep.subr.bf16.mxu0 0
        %1924 = vmatpush1.bf16.msra.mxu0 0
        %1925 = vmatprep.mubr.bf16.mxu0 0
        %1926 = vmatmul.mubr.bf16.gmra.mrb[0].mxu0 %v1867
        %v1927 = vpop.f32.mrb[0].mxu0
        %v1928 = vadd.f32 0.0, %v1927
        %v1929 = vpop.f32.mrb[0].mxu0
        %v1930 = vpop.f32.mrb[0].mxu0
        %v1931 = vadd.f32 0.0, %v1930
        %v1932 = vpop.f32.mrb[0].mxu0
        %1933 = vmatprep.mubr.bf16.mxu0 0
        %1934 = vmatmul.mubr.bf16.gmra.mrb[0].mxu0 %v1870
        %v1935 = vpop.f32.mrb[0].mxu0
        %v1936 = vadd.f32 0.0, %v1935
        %v1937 = vpop.f32.mrb[0].mxu0
        %v1938 = vpop.f32.mrb[0].mxu0
        %v1939 = vadd.f32 0.0, %v1938
        %v1940 = vpop.f32.mrb[0].mxu0
        %1941 = vmatprep.mubr.bf16.mxu0 0
        %1942 = vmatmul.mubr.bf16.gmra.mrb[0].mxu0 %v1873
        %v1943 = vpop.f32.mrb[0].mxu0
        %v1944 = vadd.f32 0.0, %v1943
        %v1945 = vpop.f32.mrb[0].mxu0
        %v1946 = vpop.f32.mrb[0].mxu0
        %v1947 = vadd.f32 0.0, %v1946
        %v1948 = vpop.f32.mrb[0].mxu0
        %1949 = vmatprep.mubr.bf16.mxu0 0
        %1950 = vmatmul.mubr.bf16.gmra.mrb[0].mxu0 %v1876
        %v1951 = vpop.f32.mrb[0].mxu0
        %v1952 = vadd.f32 0.0, %v1951
        %v1953 = vpop.f32.mrb[0].mxu0
        %v1954 = vpop.f32.mrb[0].mxu0
        %v1955 = vadd.f32 0.0, %v1954
        %v1956 = vpop.f32.mrb[0].mxu0
        %1957 = vmatprep.mubr.bf16.mxu0 0
        %1958 = vmatmul.mubr.bf16.gmra.mrb[0].mxu0 %v1879
        %v1959 = vpop.f32.mrb[0].mxu0
        %v1960 = vadd.f32 0.0, %v1959
        %v1961 = vpop.f32.mrb[0].mxu0
        %v1962 = vpop.f32.mrb[0].mxu0
        %v1963 = vadd.f32 0.0, %v1962
        %v1964 = vpop.f32.mrb[0].mxu0
        %1965 = vmatprep.mubr.bf16.mxu0 0
        %1966 = vmatmul.mubr.bf16.gmra.mrb[0].mxu0 %v1882
        %v1967 = vpop.f32.mrb[0].mxu0
        %v1968 = vadd.f32 0.0, %v1967
        %v1969 = vpop.f32.mrb[0].mxu0
        %v1970 = vpop.f32.mrb[0].mxu0
        %v1971 = vadd.f32 0.0, %v1970
        %v1972 = vpop.f32.mrb[0].mxu0
        %1973 = vmatprep.mubr.bf16.mxu0 0
        %1974 = vmatmul.mubr.bf16.gmra.mrb[0].mxu0 %v1885
        %v1975 = vpop.f32.mrb[0].mxu0
        %v1976 = vadd.f32 0.0, %v1975
        %v1977 = vpop.f32.mrb[0].mxu0
        %v1978 = vpop.f32.mrb[0].mxu0
        %v1979 = vadd.f32 0.0, %v1978
        %v1980 = vpop.f32.mrb[0].mxu0
        %1981 = vmatprep.mubr.bf16.mxu0 0
        %1982 = vmatmul.mubr.bf16.gmra.mrb[0].mxu0 %v1888
        %v1983 = vpop.f32.mrb[0].mxu0
        %v1984 = vadd.f32 0.0, %v1983
        %v1985 = vpop.f32.mrb[0].mxu0
        %v1986 = vpop.f32.mrb[0].mxu0
        %v1987 = vadd.f32 0.0, %v1986
        %v1988 = vpop.f32.mrb[0].mxu0
        %1989 = vdwg.mxu0
        %v1990 = vadd.f32 %v1808, %v1928
        %v1991 = vadd.f32 %v1809, %v1931
        %v1992 = vadd.f32 %v1810, %v1936
        %v1993 = vadd.f32 %v1811, %v1939
        %v1994 = vadd.f32 %v1812, %v1944
        %v1995 = vadd.f32 %v1813, %v1947
        %v1996 = vadd.f32 %v1814, %v1952
        %v1997 = vadd.f32 %v1815, %v1955
        %v1998 = vadd.f32 %v1816, %v1960
        %v1999 = vadd.f32 %v1817, %v1963
        %v2000 = vadd.f32 %v1818, %v1968
        %v2001 = vadd.f32 %v1819, %v1971
        %v2002 = vadd.f32 %v1820, %v1976
        %v2003 = vadd.f32 %v1821, %v1979
        %v2004 = vadd.f32 %v1822, %v1984
        %v2005 = vadd.f32 %v1823, %v1987
        %v2007 = vshrl.u32 %v243, 16
        %v2009 = vrot.slane %v2007, 4
        %v2010 = vshll.u32 %v243, 16
        %v2012 = vrot.slane %v2010, 5
        %v2013 = vor.u32 %v2009, %v2012
        %v2014 = vrot.slane %v2013, 4
        %v2016 = vshll.u32 %v244, 16
        %v2018 = vrot.slane %v2016, 5
        %v2019 = vsel %vm312, %v2014, %v2018
        %v2020 = vshrl.u32 %v244, 16
        %v2022 = vrot.slane %v2020, 4
        %v2023 = vor.u32 %v2022, %v2018
        %v2024 = vrot.slane %v2023, 4
        %v2026 = vshll.u32 %v245, 16
        %v2028 = vrot.slane %v2026, 5
        %v2029 = vsel %vm312, %v2024, %v2028
        %v2031 = vshrl.u32 %v252, 16
        %v2033 = vrot.slane %v2031, 4
        %v2034 = vshll.u32 %v252, 16
        %v2036 = vrot.slane %v2034, 5
        %v2037 = vor.u32 %v2033, %v2036
        %v2038 = vrot.slane %v2037, 4
        %v2040 = vshll.u32 %v253, 16
        %v2042 = vrot.slane %v2040, 5
        %v2043 = vsel %vm312, %v2038, %v2042
        %v2044 = vshrl.u32 %v253, 16
        %v2046 = vrot.slane %v2044, 4
        %v2047 = vor.u32 %v2046, %v2042
        %v2048 = vrot.slane %v2047, 4
        %v2050 = vshll.u32 %v254, 16
        %v2052 = vrot.slane %v2050, 5
        %v2053 = vsel %vm312, %v2048, %v2052
        %v2055 = vshrl.u32 %v261, 16
        %v2057 = vrot.slane %v2055, 4
        %v2058 = vshll.u32 %v261, 16
        %v2060 = vrot.slane %v2058, 5
        %v2061 = vor.u32 %v2057, %v2060
        %v2062 = vrot.slane %v2061, 4
        %v2064 = vshll.u32 %v262, 16
        %v2066 = vrot.slane %v2064, 5
        %v2067 = vsel %vm312, %v2062, %v2066
        %v2068 = vshrl.u32 %v262, 16
        %v2070 = vrot.slane %v2068, 4
        %v2071 = vor.u32 %v2070, %v2066
        %v2072 = vrot.slane %v2071, 4
        %v2074 = vshll.u32 %v263, 16
        %v2076 = vrot.slane %v2074, 5
        %v2077 = vsel %vm312, %v2072, %v2076
        %v2079 = vshrl.u32 %v270, 16
        %v2081 = vrot.slane %v2079, 4
        %v2082 = vshll.u32 %v270, 16
        %v2084 = vrot.slane %v2082, 5
        %v2085 = vor.u32 %v2081, %v2084
        %v2086 = vrot.slane %v2085, 4
        %v2088 = vshll.u32 %v271, 16
        %v2090 = vrot.slane %v2088, 5
        %v2091 = vsel %vm312, %v2086, %v2090
        %v2092 = vshrl.u32 %v271, 16
        %v2094 = vrot.slane %v2092, 4
        %v2095 = vor.u32 %v2094, %v2090
        %v2096 = vrot.slane %v2095, 4
        %v2098 = vshll.u32 %v272, 16
        %v2100 = vrot.slane %v2098, 5
        %v2101 = vsel %vm312, %v2096, %v2100
        %v2103 = vshrl.u32 %v279, 16
        %v2105 = vrot.slane %v2103, 4
        %v2106 = vshll.u32 %v279, 16
        %v2108 = vrot.slane %v2106, 5
        %v2109 = vor.u32 %v2105, %v2108
        %v2110 = vrot.slane %v2109, 4
        %v2112 = vshll.u32 %v280, 16
        %v2114 = vrot.slane %v2112, 5
        %v2115 = vsel %vm312, %v2110, %v2114
        %v2116 = vshrl.u32 %v280, 16
        %v2118 = vrot.slane %v2116, 4
        %v2119 = vor.u32 %v2118, %v2114
        %v2120 = vrot.slane %v2119, 4
        %v2122 = vshll.u32 %v281, 16
        %v2124 = vrot.slane %v2122, 5
        %v2125 = vsel %vm312, %v2120, %v2124
        %v2127 = vshrl.u32 %v288, 16
        %v2129 = vrot.slane %v2127, 4
        %v2130 = vshll.u32 %v288, 16
        %v2132 = vrot.slane %v2130, 5
        %v2133 = vor.u32 %v2129, %v2132
        %v2134 = vrot.slane %v2133, 4
        %v2136 = vshll.u32 %v289, 16
        %v2138 = vrot.slane %v2136, 5
        %v2139 = vsel %vm312, %v2134, %v2138
        %v2140 = vshrl.u32 %v289, 16
        %v2142 = vrot.slane %v2140, 4
        %v2143 = vor.u32 %v2142, %v2138
        %v2144 = vrot.slane %v2143, 4
        %v2146 = vshll.u32 %v290, 16
        %v2148 = vrot.slane %v2146, 5
        %v2149 = vsel %vm312, %v2144, %v2148
        %v2151 = vshrl.u32 %v297, 16
        %v2153 = vrot.slane %v2151, 4
        %v2154 = vshll.u32 %v297, 16
        %v2156 = vrot.slane %v2154, 5
        %v2157 = vor.u32 %v2153, %v2156
        %v2158 = vrot.slane %v2157, 4
        %v2160 = vshll.u32 %v298, 16
        %v2162 = vrot.slane %v2160, 5
        %v2163 = vsel %vm312, %v2158, %v2162
        %v2164 = vshrl.u32 %v298, 16
        %v2166 = vrot.slane %v2164, 4
        %v2167 = vor.u32 %v2166, %v2162
        %v2168 = vrot.slane %v2167, 4
        %v2170 = vshll.u32 %v299, 16
        %v2172 = vrot.slane %v2170, 5
        %v2173 = vsel %vm312, %v2168, %v2172
        %v2175 = vshrl.u32 %v306, 16
        %v2177 = vrot.slane %v2175, 4
        %v2178 = vshll.u32 %v306, 16
        %v2180 = vrot.slane %v2178, 5
        %v2181 = vor.u32 %v2177, %v2180
        %v2182 = vrot.slane %v2181, 4
        %v2184 = vshll.u32 %v307, 16
        %v2186 = vrot.slane %v2184, 5
        %v2187 = vsel %vm312, %v2182, %v2186
        %v2188 = vshrl.u32 %v307, 16
        %v2190 = vrot.slane %v2188, 4
        %v2191 = vor.u32 %v2190, %v2186
        %v2192 = vrot.slane %v2191, 4
        %v2194 = vshll.u32 %v308, 16
        %v2196 = vrot.slane %v2194, 5
        %v2197 = vsel %vm312, %v2192, %v2196
        %s2198 = scalar_lea.vmem [#allocation5], 28
        %v2199 = vld [vmem:[%s2198] sm:$0xf]
        %v2200 = vunpack.c.l.b16 %v2019
        %v2201 = vunpack.c.l.b16 %v2029
        %v2202 = vunpack.c.l.b16 %v2043
        %v2203 = vunpack.c.l.b16 %v2053
        %v2204 = vunpack.c.l.b16 %v2067
        %v2205 = vunpack.c.l.b16 %v2077
        %v2206 = vunpack.c.l.b16 %v2091
        %v2207 = vunpack.c.l.b16 %v2101
        %v2208 = vunpack.c.l.b16 %v2115
        %v2209 = vunpack.c.l.b16 %v2125
        %v2210 = vunpack.c.l.b16 %v2139
        %v2211 = vunpack.c.l.b16 %v2149
        %v2212 = vunpack.c.l.b16 %v2163
        %v2213 = vunpack.c.l.b16 %v2173
        %v2214 = vunpack.c.l.b16 %v2187
        %v2215 = vunpack.c.l.b16 %v2197
        %v2216 = vpack.c.b16 %v2201, %v2200
        %v2217 = vpack.c.b16 %v2203, %v2202
        %v2218 = vpack.c.b16 %v2205, %v2204
        %v2219 = vpack.c.b16 %v2207, %v2206
        %v2220 = vpack.c.b16 %v2209, %v2208
        %v2221 = vpack.c.b16 %v2211, %v2210
        %v2222 = vpack.c.b16 %v2213, %v2212
        %v2223 = vpack.c.b16 %v2215, %v2214
        %v2225 = vsel %vm531, %v2216, 0
        %v2228 = vsel %vm531, %v2217, 0
        %v2231 = vsel %vm531, %v2218, 0
        %v2234 = vsel %vm531, %v2219, 0
        %v2237 = vsel %vm531, %v2220, 0
        %v2240 = vsel %vm531, %v2221, 0
        %v2243 = vsel %vm531, %v2222, 0
        %v2246 = vsel %vm531, %v2223, 0
        %v2249 = vsel %vm556, %v2199, 0
        %2251 = vmatprep.subr.bf16.mxu0 0
        %2252 = vmatpush1.bf16.msra.mxu0 %v2249
        %2253 = vmatprep.subr.bf16.mxu0 0
        %2254 = vmatpush1.bf16.msra.mxu0 0
        %2255 = vmatprep.subr.bf16.mxu0 0
        %2256 = vmatpush1.bf16.msra.mxu0 0
        %2257 = vmatprep.subr.bf16.mxu0 0
        %2258 = vmatpush1.bf16.msra.mxu0 0
        %2259 = vmatprep.subr.bf16.mxu0 0
        %2260 = vmatpush1.bf16.msra.mxu0 0
        %2261 = vmatprep.subr.bf16.mxu0 0
        %2262 = vmatpush1.bf16.msra.mxu0 0
        %2263 = vmatprep.subr.bf16.mxu0 0
        %2264 = vmatpush1.bf16.msra.mxu0 0
        %2265 = vmatprep.subr.bf16.mxu0 0
        %2266 = vmatpush1.bf16.msra.mxu0 0
        %2267 = vmatprep.subr.bf16.mxu0 0
        %2268 = vmatpush1.bf16.msra.mxu0 0
        %2269 = vmatprep.subr.bf16.mxu0 0
        %2270 = vmatpush1.bf16.msra.mxu0 0
        %2271 = vmatprep.subr.bf16.mxu0 0
        %2272 = vmatpush1.bf16.msra.mxu0 0
        %2273 = vmatprep.subr.bf16.mxu0 0
        %2274 = vmatpush1.bf16.msra.mxu0 0
        %2275 = vmatprep.subr.bf16.mxu0 0
        %2276 = vmatpush1.bf16.msra.mxu0 0
        %2277 = vmatprep.subr.bf16.mxu0 0
        %2278 = vmatpush1.bf16.msra.mxu0 0
        %2279 = vmatprep.subr.bf16.mxu0 0
        %2280 = vmatpush1.bf16.msra.mxu0 0
        %2281 = vmatprep.subr.bf16.mxu0 0
        %2282 = vmatpush1.bf16.msra.mxu0 0
        %2283 = vmatprep.mubr.bf16.mxu0 0
        %2284 = vmatmul.mubr.bf16.gmra.mrb[0].mxu0 %v2225
        %v2285 = vpop.f32.mrb[0].mxu0
        %v2286 = vadd.f32 0.0, %v2285
        %v2287 = vpop.f32.mrb[0].mxu0
        %v2288 = vpop.f32.mrb[0].mxu0
        %v2289 = vadd.f32 0.0, %v2288
        %v2290 = vpop.f32.mrb[0].mxu0
        %2291 = vmatprep.mubr.bf16.mxu0 0
        %2292 = vmatmul.mubr.bf16.gmra.mrb[0].mxu0 %v2228
        %v2293 = vpop.f32.mrb[0].mxu0
        %v2294 = vadd.f32 0.0, %v2293
        %v2295 = vpop.f32.mrb[0].mxu0
        %v2296 = vpop.f32.mrb[0].mxu0
        %v2297 = vadd.f32 0.0, %v2296
        %v2298 = vpop.f32.mrb[0].mxu0
        %2299 = vmatprep.mubr.bf16.mxu0 0
        %2300 = vmatmul.mubr.bf16.gmra.mrb[0].mxu0 %v2231
        %v2301 = vpop.f32.mrb[0].mxu0
        %v2302 = vadd.f32 0.0, %v2301
        %v2303 = vpop.f32.mrb[0].mxu0
        %v2304 = vpop.f32.mrb[0].mxu0
        %v2305 = vadd.f32 0.0, %v2304
        %v2306 = vpop.f32.mrb[0].mxu0
        %2307 = vmatprep.mubr.bf16.mxu0 0
        %2308 = vmatmul.mubr.bf16.gmra.mrb[0].mxu0 %v2234
        %v2309 = vpop.f32.mrb[0].mxu0
        %v2310 = vadd.f32 0.0, %v2309
        %v2311 = vpop.f32.mrb[0].mxu0
        %v2312 = vpop.f32.mrb[0].mxu0
        %v2313 = vadd.f32 0.0, %v2312
        %v2314 = vpop.f32.mrb[0].mxu0
        %2315 = vmatprep.mubr.bf16.mxu0 0
        %2316 = vmatmul.mubr.bf16.gmra.mrb[0].mxu0 %v2237
        %v2317 = vpop.f32.mrb[0].mxu0
        %v2318 = vadd.f32 0.0, %v2317
        %v2319 = vpop.f32.mrb[0].mxu0
        %v2320 = vpop.f32.mrb[0].mxu0
        %v2321 = vadd.f32 0.0, %v2320
        %v2322 = vpop.f32.mrb[0].mxu0
        %2323 = vmatprep.mubr.bf16.mxu0 0
        %2324 = vmatmul.mubr.bf16.gmra.mrb[0].mxu0 %v2240
        %v2325 = vpop.f32.mrb[0].mxu0
        %v2326 = vadd.f32 0.0, %v2325
        %v2327 = vpop.f32.mrb[0].mxu0
        %v2328 = vpop.f32.mrb[0].mxu0
        %v2329 = vadd.f32 0.0, %v2328
        %v2330 = vpop.f32.mrb[0].mxu0
        %2331 = vmatprep.mubr.bf16.mxu0 0
        %2332 = vmatmul.mubr.bf16.gmra.mrb[0].mxu0 %v2243
        %v2333 = vpop.f32.mrb[0].mxu0
        %v2334 = vadd.f32 0.0, %v2333
        %v2335 = vpop.f32.mrb[0].mxu0
        %v2336 = vpop.f32.mrb[0].mxu0
        %v2337 = vadd.f32 0.0, %v2336
        %v2338 = vpop.f32.mrb[0].mxu0
        %2339 = vmatprep.mubr.bf16.mxu0 0
        %2340 = vmatmul.mubr.bf16.gmra.mrb[0].mxu0 %v2246
        %v2341 = vpop.f32.mrb[0].mxu0
        %v2342 = vadd.f32 0.0, %v2341
        %v2343 = vpop.f32.mrb[0].mxu0
        %v2344 = vpop.f32.mrb[0].mxu0
        %v2345 = vadd.f32 0.0, %v2344
        %v2346 = vpop.f32.mrb[0].mxu0
        %2347 = vdwg.mxu0
        %v2348 = vadd.f32 %v1990, %v2286
        %v2349 = vadd.f32 %v1991, %v2289
        %v2350 = vadd.f32 %v1992, %v2294
        %v2351 = vadd.f32 %v1993, %v2297
        %v2352 = vadd.f32 %v1994, %v2302
        %v2353 = vadd.f32 %v1995, %v2305
        %v2354 = vadd.f32 %v1996, %v2310
        %v2355 = vadd.f32 %v1997, %v2313
        %v2356 = vadd.f32 %v1998, %v2318
        %v2357 = vadd.f32 %v1999, %v2321
        %v2358 = vadd.f32 %v2000, %v2326
        %v2359 = vadd.f32 %v2001, %v2329
        %v2360 = vadd.f32 %v2002, %v2334
        %v2361 = vadd.f32 %v2003, %v2337
        %v2362 = vadd.f32 %v2004, %v2342
        %v2363 = vadd.f32 %v2005, %v2345
        %v2372 = vrot.slane %v243, 5
        %v2373 = vrot.slane %v2372, 4
        %v2374 = vrot.slane %v244, 5
        %v2375 = vsel %vm831, %v2373, %v2374
        %v2376 = vrot.slane %v2374, 4
        %v2377 = vrot.slane %v245, 5
        %v2378 = vsel %vm831, %v2376, %v2377
        %v2379 = vrot.slane %v252, 5
        %v2380 = vrot.slane %v2379, 4
        %v2381 = vrot.slane %v253, 5
        %v2382 = vsel %vm831, %v2380, %v2381
        %v2383 = vrot.slane %v2381, 4
        %v2384 = vrot.slane %v254, 5
        %v2385 = vsel %vm831, %v2383, %v2384
        %v2386 = vrot.slane %v261, 5
        %v2387 = vrot.slane %v2386, 4
        %v2388 = vrot.slane %v262, 5
        %v2389 = vsel %vm831, %v2387, %v2388
        %v2390 = vrot.slane %v2388, 4
        %v2391 = vrot.slane %v263, 5
        %v2392 = vsel %vm831, %v2390, %v2391
        %v2393 = vrot.slane %v270, 5
        %v2394 = vrot.slane %v2393, 4
        %v2395 = vrot.slane %v271, 5
        %v2396 = vsel %vm831, %v2394, %v2395
        %v2397 = vrot.slane %v2395, 4
        %v2398 = vrot.slane %v272, 5
        %v2399 = vsel %vm831, %v2397, %v2398
        %v2400 = vrot.slane %v279, 5
        %v2401 = vrot.slane %v2400, 4
        %v2402 = vrot.slane %v280, 5
        %v2403 = vsel %vm831, %v2401, %v2402
        %v2404 = vrot.slane %v2402, 4
        %v2405 = vrot.slane %v281, 5
        %v2406 = vsel %vm831, %v2404, %v2405
        %v2407 = vrot.slane %v288, 5
        %v2408 = vrot.slane %v2407, 4
        %v2409 = vrot.slane %v289, 5
        %v2410 = vsel %vm831, %v2408, %v2409
        %v2411 = vrot.slane %v2409, 4
        %v2412 = vrot.slane %v290, 5
        %v2413 = vsel %vm831, %v2411, %v2412
        %v2414 = vrot.slane %v297, 5
        %v2415 = vrot.slane %v2414, 4
        %v2416 = vrot.slane %v298, 5
        %v2417 = vsel %vm831, %v2415, %v2416
        %v2418 = vrot.slane %v2416, 4
        %v2419 = vrot.slane %v299, 5
        %v2420 = vsel %vm831, %v2418, %v2419
        %v2421 = vrot.slane %v306, 5
        %v2422 = vrot.slane %v2421, 4
        %v2423 = vrot.slane %v307, 5
        %v2424 = vsel %vm831, %v2422, %v2423
        %v2425 = vrot.slane %v2423, 4
        %v2426 = vrot.slane %v308, 5
        %v2427 = vsel %vm831, %v2425, %v2426
        %s2428 = scalar_lea.vmem [#allocation5], 32
        %v2429 = vld [vmem:[%s2428] sm:$0xf]
        %v2430 = vunpack.c.l.b16 %v2375
        %v2431 = vunpack.c.l.b16 %v2378
        %v2432 = vunpack.c.l.b16 %v2382
        %v2433 = vunpack.c.l.b16 %v2385
        %v2434 = vunpack.c.l.b16 %v2389
        %v2435 = vunpack.c.l.b16 %v2392
        %v2436 = vunpack.c.l.b16 %v2396
        %v2437 = vunpack.c.l.b16 %v2399
        %v2438 = vunpack.c.l.b16 %v2403
        %v2439 = vunpack.c.l.b16 %v2406
        %v2440 = vunpack.c.l.b16 %v2410
        %v2441 = vunpack.c.l.b16 %v2413
        %v2442 = vunpack.c.l.b16 %v2417
        %v2443 = vunpack.c.l.b16 %v2420
        %v2444 = vunpack.c.l.b16 %v2424
        %v2445 = vunpack.c.l.b16 %v2427
        %v2446 = vpack.c.b16 %v2431, %v2430
        %v2447 = vpack.c.b16 %v2433, %v2432
        %v2448 = vpack.c.b16 %v2435, %v2434
        %v2449 = vpack.c.b16 %v2437, %v2436
        %v2450 = vpack.c.b16 %v2439, %v2438
        %v2451 = vpack.c.b16 %v2441, %v2440
        %v2452 = vpack.c.b16 %v2443, %v2442
        %v2453 = vpack.c.b16 %v2445, %v2444
        %v2455 = vsel %vm531, %v2446, 0
        %v2458 = vsel %vm531, %v2447, 0
        %v2461 = vsel %vm531, %v2448, 0
        %v2464 = vsel %vm531, %v2449, 0
        %v2467 = vsel %vm531, %v2450, 0
        %v2470 = vsel %vm531, %v2451, 0
        %v2473 = vsel %vm531, %v2452, 0
        %v2476 = vsel %vm531, %v2453, 0
        %v2479 = vsel %vm556, %v2429, 0
        %2481 = vmatprep.subr.bf16.mxu0 0
        %2482 = vmatpush1.bf16.msra.mxu0 %v2479
        %2483 = vmatprep.subr.bf16.mxu0 0
        %2484 = vmatpush1.bf16.msra.mxu0 0
        %2485 = vmatprep.subr.bf16.mxu0 0
        %2486 = vmatpush1.bf16.msra.mxu0 0
        %2487 = vmatprep.subr.bf16.mxu0 0
        %2488 = vmatpush1.bf16.msra.mxu0 0
        %2489 = vmatprep.subr.bf16.mxu0 0
        %2490 = vmatpush1.bf16.msra.mxu0 0
        %2491 = vmatprep.subr.bf16.mxu0 0
        %2492 = vmatpush1.bf16.msra.mxu0 0
        %2493 = vmatprep.subr.bf16.mxu0 0
        %2494 = vmatpush1.bf16.msra.mxu0 0
        %2495 = vmatprep.subr.bf16.mxu0 0
        %2496 = vmatpush1.bf16.msra.mxu0 0
        %2497 = vmatprep.subr.bf16.mxu0 0
        %2498 = vmatpush1.bf16.msra.mxu0 0
        %2499 = vmatprep.subr.bf16.mxu0 0
        %2500 = vmatpush1.bf16.msra.mxu0 0
        %2501 = vmatprep.subr.bf16.mxu0 0
        %2502 = vmatpush1.bf16.msra.mxu0 0
        %2503 = vmatprep.subr.bf16.mxu0 0
        %2504 = vmatpush1.bf16.msra.mxu0 0
        %2505 = vmatprep.subr.bf16.mxu0 0
        %2506 = vmatpush1.bf16.msra.mxu0 0
        %2507 = vmatprep.subr.bf16.mxu0 0
        %2508 = vmatpush1.bf16.msra.mxu0 0
        %2509 = vmatprep.subr.bf16.mxu0 0
        %2510 = vmatpush1.bf16.msra.mxu0 0
        %2511 = vmatprep.subr.bf16.mxu0 0
        %2512 = vmatpush1.bf16.msra.mxu0 0
        %2513 = vmatprep.mubr.bf16.mxu0 0
        %2514 = vmatmul.mubr.bf16.gmra.mrb[0].mxu0 %v2455
        %v2515 = vpop.f32.mrb[0].mxu0
        %v2516 = vadd.f32 0.0, %v2515
        %v2517 = vpop.f32.mrb[0].mxu0
        %v2518 = vpop.f32.mrb[0].mxu0
        %v2519 = vadd.f32 0.0, %v2518
        %v2520 = vpop.f32.mrb[0].mxu0
        %2521 = vmatprep.mubr.bf16.mxu0 0
        %2522 = vmatmul.mubr.bf16.gmra.mrb[0].mxu0 %v2458
        %v2523 = vpop.f32.mrb[0].mxu0
        %v2524 = vadd.f32 0.0, %v2523
        %v2525 = vpop.f32.mrb[0].mxu0
        %v2526 = vpop.f32.mrb[0].mxu0
        %v2527 = vadd.f32 0.0, %v2526
        %v2528 = vpop.f32.mrb[0].mxu0
        %2529 = vmatprep.mubr.bf16.mxu0 0
        %2530 = vmatmul.mubr.bf16.gmra.mrb[0].mxu0 %v2461
        %v2531 = vpop.f32.mrb[0].mxu0
        %v2532 = vadd.f32 0.0, %v2531
        %v2533 = vpop.f32.mrb[0].mxu0
        %v2534 = vpop.f32.mrb[0].mxu0
        %v2535 = vadd.f32 0.0, %v2534
        %v2536 = vpop.f32.mrb[0].mxu0
        %2537 = vmatprep.mubr.bf16.mxu0 0
        %2538 = vmatmul.mubr.bf16.gmra.mrb[0].mxu0 %v2464
        %v2539 = vpop.f32.mrb[0].mxu0
        %v2540 = vadd.f32 0.0, %v2539
        %v2541 = vpop.f32.mrb[0].mxu0
        %v2542 = vpop.f32.mrb[0].mxu0
        %v2543 = vadd.f32 0.0, %v2542
        %v2544 = vpop.f32.mrb[0].mxu0
        %2545 = vmatprep.mubr.bf16.mxu0 0
        %2546 = vmatmul.mubr.bf16.gmra.mrb[0].mxu0 %v2467
        %v2547 = vpop.f32.mrb[0].mxu0
        %v2548 = vadd.f32 0.0, %v2547
        %v2549 = vpop.f32.mrb[0].mxu0
        %v2550 = vpop.f32.mrb[0].mxu0
        %v2551 = vadd.f32 0.0, %v2550
        %v2552 = vpop.f32.mrb[0].mxu0
        %2553 = vmatprep.mubr.bf16.mxu0 0
        %2554 = vmatmul.mubr.bf16.gmra.mrb[0].mxu0 %v2470
        %v2555 = vpop.f32.mrb[0].mxu0
        %v2556 = vadd.f32 0.0, %v2555
        %v2557 = vpop.f32.mrb[0].mxu0
        %v2558 = vpop.f32.mrb[0].mxu0
        %v2559 = vadd.f32 0.0, %v2558
        %v2560 = vpop.f32.mrb[0].mxu0
        %2561 = vmatprep.mubr.bf16.mxu0 0
        %2562 = vmatmul.mubr.bf16.gmra.mrb[0].mxu0 %v2473
        %v2563 = vpop.f32.mrb[0].mxu0
        %v2564 = vadd.f32 0.0, %v2563
        %v2565 = vpop.f32.mrb[0].mxu0
        %v2566 = vpop.f32.mrb[0].mxu0
        %v2567 = vadd.f32 0.0, %v2566
        %v2568 = vpop.f32.mrb[0].mxu0
        %2569 = vmatprep.mubr.bf16.mxu0 0
        %2570 = vmatmul.mubr.bf16.gmra.mrb[0].mxu0 %v2476
        %v2571 = vpop.f32.mrb[0].mxu0
        %v2572 = vadd.f32 0.0, %v2571
        %v2573 = vpop.f32.mrb[0].mxu0
        %v2574 = vpop.f32.mrb[0].mxu0
        %v2575 = vadd.f32 0.0, %v2574
        %v2576 = vpop.f32.mrb[0].mxu0
        %2577 = vdwg.mxu0
        %v2578 = vadd.f32 %v2348, %v2516
        %v2579 = vadd.f32 %v2349, %v2519
        %v2580 = vadd.f32 %v2350, %v2524
        %v2581 = vadd.f32 %v2351, %v2527
        %v2582 = vadd.f32 %v2352, %v2532
        %v2583 = vadd.f32 %v2353, %v2535
        %v2584 = vadd.f32 %v2354, %v2540
        %v2585 = vadd.f32 %v2355, %v2543
        %v2586 = vadd.f32 %v2356, %v2548
        %v2587 = vadd.f32 %v2357, %v2551
        %v2588 = vadd.f32 %v2358, %v2556
        %v2589 = vadd.f32 %v2359, %v2559
        %v2590 = vadd.f32 %v2360, %v2564
        %v2591 = vadd.f32 %v2361, %v2567
        %v2592 = vadd.f32 %v2362, %v2572
        %v2593 = vadd.f32 %v2363, %v2575
        %v2594 = vpack.c.bf16 %v2579, %v2578
        %v2595 = vpack.c.bf16 %v2581, %v2580
        %v2596 = vpack.c.bf16 %v2583, %v2582
        %v2597 = vpack.c.bf16 %v2585, %v2584
        %v2598 = vpack.c.bf16 %v2587, %v2586
        %v2599 = vpack.c.bf16 %v2589, %v2588
        %v2600 = vpack.c.bf16 %v2591, %v2590
        %v2601 = vpack.c.bf16 %v2593, %v2592
        %v2610 = vunpack.c.l.b16 %v2594
        %v2611 = vunpack.c.h.b16 %v2594
        %v2612 = vunpack.c.l.b16 %v2595
        %v2613 = vunpack.c.h.b16 %v2595
        %v2614 = vunpack.c.l.b16 %v2596
        %v2615 = vunpack.c.h.b16 %v2596
        %v2616 = vunpack.c.l.b16 %v2597
        %v2617 = vunpack.c.h.b16 %v2597
        %v2618 = vunpack.c.l.b16 %v2598
        %v2619 = vunpack.c.h.b16 %v2598
        %v2620 = vunpack.c.l.b16 %v2599
        %v2621 = vunpack.c.h.b16 %v2599
        %v2622 = vunpack.c.l.b16 %v2600
        %v2623 = vunpack.c.h.b16 %v2600
        %v2624 = vunpack.c.l.b16 %v2601
        %v2625 = vunpack.c.h.b16 %v2601
        %v2626 = vpack.c.b16 %v2610, %v2610
        %v2627 = vpack.c.b16 %v2611, %v2611
        %v2628 = vpack.c.b16 %v2612, %v2612
        %v2629 = vpack.c.b16 %v2613, %v2613
        %v2630 = vpack.c.b16 %v2614, %v2614
        %v2631 = vpack.c.b16 %v2615, %v2615
        %v2632 = vpack.c.b16 %v2616, %v2616
        %v2633 = vpack.c.b16 %v2617, %v2617
        %v2634 = vpack.c.b16 %v2618, %v2618
        %v2635 = vpack.c.b16 %v2619, %v2619
        %v2636 = vpack.c.b16 %v2620, %v2620
        %v2637 = vpack.c.b16 %v2621, %v2621
        %v2638 = vpack.c.b16 %v2622, %v2622
        %v2639 = vpack.c.b16 %v2623, %v2623
        %v2640 = vpack.c.b16 %v2624, %v2624
        %v2641 = vpack.c.b16 %v2625, %v2625
        %2658 = vst [vmem:[%s223] sm:$0xf] %v2626
        %2659 = vst [vmem:[%s223 + $0x4] sm:$0xf] %v2627
        %2660 = vst [vmem:[%s223 + $0x8] sm:$0xf] %v2628
        %2661 = vst [vmem:[%s223 + $0xc] sm:$0xf] %v2629
        %2662 = vst [vmem:[%s223 + $0x10] sm:$0xf] %v2630
        %2663 = vst [vmem:[%s223 + $0x14] sm:$0xf] %v2631
        %2664 = vst [vmem:[%s223 + $0x18] sm:$0xf] %v2632
        %2665 = vst [vmem:[%s223 + $0x1c] sm:$0xf] %v2633
        %2666 = vst [vmem:[%s223 + $0x20] sm:$0xf] %v2634
        %2667 = vst [vmem:[%s223 + $0x24] sm:$0xf] %v2635
        %2668 = vst [vmem:[%s223 + $0x28] sm:$0xf] %v2636
        %2669 = vst [vmem:[%s223 + $0x2c] sm:$0xf] %v2637
        %2670 = vst [vmem:[%s223 + $0x30] sm:$0xf] %v2638
        %2671 = vst [vmem:[%s223 + $0x34] sm:$0xf] %v2639
        %2672 = vst [vmem:[%s223 + $0x38] sm:$0xf] %v2640
        %2673 = vst [vmem:[%s223 + $0x3c] sm:$0xf] %v2641
        %v2674 = vld [vmem:[#allocation8] sm:$0x1]
        %v2675 = vadd.f32 %v2578, %v2579
        %v2676 = vadd.f32 %v2675, %v2580
        %v2677 = vadd.f32 %v2676, %v2581
        %v2678 = vadd.f32 %v2677, %v2582
        %v2679 = vadd.f32 %v2678, %v2583
        %v2680 = vadd.f32 %v2679, %v2584
        %v2681 = vadd.f32 %v2680, %v2585
        %v2682 = vadd.f32 %v2681, %v2586
        %v2683 = vadd.f32 %v2682, %v2587
        %v2684 = vadd.f32 %v2683, %v2588
        %v2685 = vadd.f32 %v2684, %v2589
        %v2686 = vadd.f32 %v2685, %v2590
        %v2687 = vadd.f32 %v2686, %v2591
        %v2688 = vadd.f32 %v2687, %v2592
        %v2689 = vadd.f32 %v2688, %v2593
        %v2690 = vrot.slane %v2689, 4
        %v2691 = vadd.f32 %v2689, %v2690
        %v2692 = vrot.slane %v2691, 2
        %v2693 = vadd.f32 %v2691, %v2692
        %v2694 = vrot.slane %v2693, 1
        %v2695 = vadd.f32 %v2693, %v2694
        %v2696 = vadd.f32 %v2674, %v2695
        %2697 = vst [vmem:[#allocation8] sm:$0x1] %v2696
        %v2698 = vld [vmem:[#allocation10] sm:$0x1]
        %v2699 = vmul.f32 %v2578, %v2578
        %v2700 = vmul.f32 %v2579, %v2579
        %v2701 = vmul.f32 %v2580, %v2580
        %v2702 = vmul.f32 %v2581, %v2581
        %v2703 = vmul.f32 %v2582, %v2582
        %v2704 = vmul.f32 %v2583, %v2583
        %v2705 = vmul.f32 %v2584, %v2584
        %v2706 = vmul.f32 %v2585, %v2585
        %v2707 = vmul.f32 %v2586, %v2586
        %v2708 = vmul.f32 %v2587, %v2587
        %v2709 = vmul.f32 %v2588, %v2588
        %v2710 = vmul.f32 %v2589, %v2589
        %v2711 = vmul.f32 %v2590, %v2590
        %v2712 = vmul.f32 %v2591, %v2591
        %v2713 = vmul.f32 %v2592, %v2592
        %v2714 = vmul.f32 %v2593, %v2593
        %v2715 = vadd.f32 %v2699, %v2700
        %v2716 = vadd.f32 %v2715, %v2701
        %v2717 = vadd.f32 %v2716, %v2702
        %v2718 = vadd.f32 %v2717, %v2703
        %v2719 = vadd.f32 %v2718, %v2704
        %v2720 = vadd.f32 %v2719, %v2705
        %v2721 = vadd.f32 %v2720, %v2706
        %v2722 = vadd.f32 %v2721, %v2707
        %v2723 = vadd.f32 %v2722, %v2708
        %v2724 = vadd.f32 %v2723, %v2709
        %v2725 = vadd.f32 %v2724, %v2710
        %v2726 = vadd.f32 %v2725, %v2711
        %v2727 = vadd.f32 %v2726, %v2712
        %v2728 = vadd.f32 %v2727, %v2713
        %v2729 = vadd.f32 %v2728, %v2714
        %v2730 = vrot.slane %v2729, 4
        %v2731 = vadd.f32 %v2729, %v2730
        %v2732 = vrot.slane %v2731, 2
        %v2733 = vadd.f32 %v2731, %v2732
        %v2734 = vrot.slane %v2733, 1
        %v2735 = vadd.f32 %v2733, %v2734
        %v2736 = vadd.f32 %v2698, %v2735
        %2737 = vst [vmem:[#allocation10] sm:$0x1] %v2736
        %s2738 = sand.u32 %s79, 1
        %s2739 = scalar_lea.sflag [#allocation4], %s2738
        %s2740 = sand.u32 %s79, 1
        %s2741 = smul.addr %s2740, 64
        %s2742 = scalar_lea.vmem [#allocation7], %s2741
        // Predicated region
        $region41: #{tpu_custom_call.1} parent=27 // pred_check
          %p2743 = pneg %p89
        $region42: #{tpu_custom_call.1} parent=27 // pred_check_branch
          %2745 = sbr.rel (%p2743) target = $region44
        $region43: #{tpu_custom_call.1} parent=27 // pred_region
          %s2746 = smul.u32 16, %s24
          %s2748 = ssub.s32 1024, 1024
          %2749 = vsyncadd %s2739, %s2748
          %s2750 = smul.addr %s2746, 64
          %s2751 = scalar_lea.hbm %s2, %s2750
          %s2752 = sshll.u32 %s2742, 4
          %s2753 = int_to_ptr.vmem [resolvable:$true] %s2752
          %2758 = dma.vmem_to_hbm [thread:$0]  %s2753, 1024, %s2751, %s2739, 64, 64, 4
        $region44: #{tpu_custom_call.1} parent=27 // pred_fallthru
          _
        // Predicated region
        $region45: #{tpu_custom_call.1} parent=27 // pred_check
          %p2759 = pneg %p110
        $region46: #{tpu_custom_call.1} parent=27 // pred_check_branch
          %2761 = sbr.rel (%p2759) target = $region48
        $region47: #{tpu_custom_call.1} parent=27 // pred_region
          %s2763 = ssub.s32 16, 16
          %2764 = vsyncadd [#allocation9], %s2763
          %s2766 = sshll.u32 [#allocation8], 4
          %s2767 = int_to_ptr.vmem [resolvable:$true] %s2766
          %2769 = dma.vmem_to_hbm [thread:$0]  %s2767, 16, %s3, [#allocation9]
        $region48: #{tpu_custom_call.1} parent=27 // pred_fallthru
          _
        // Predicated region
        $region49: #{tpu_custom_call.1} parent=27 // pred_check
          %p2770 = pneg %p131
        $region50: #{tpu_custom_call.1} parent=27 // pred_check_branch
          %2772 = sbr.rel (%p2770) target = $region52
        $region51: #{tpu_custom_call.1} parent=27 // pred_region
          %s2774 = ssub.s32 16, 16
          %2775 = vsyncadd [#allocation9], %s2774
          %s2777 = sshll.u32 [#allocation10], 4
          %s2778 = int_to_ptr.vmem [resolvable:$true] %s2777
          %2780 = dma.vmem_to_hbm [thread:$0]  %s2778, 16, %s4, [#allocation9]
        $region52: #{tpu_custom_call.1} parent=27 // pred_fallthru
          _
        // Predicated region
        $region53: #{tpu_custom_call.1} parent=27 // pred_check
          %p2781 = pneg %p110
        $region54: #{tpu_custom_call.1} parent=27 // pred_check_branch
          %2783 = sbr.rel (%p2781) target = $region56
        $region55: #{tpu_custom_call.1} parent=27 // pred_region
          %2784 = dma.done [#allocation9], 16
        $region56: #{tpu_custom_call.1} parent=27 // pred_fallthru
          _
        // Predicated region
        $region57: #{tpu_custom_call.1} parent=27 // pred_check
          %p2785 = pneg %p131
        $region58: #{tpu_custom_call.1} parent=27 // pred_check_branch
          %2787 = sbr.rel (%p2785) target = $region60
        $region59: #{tpu_custom_call.1} parent=27 // pred_region
          %2788 = dma.done [#allocation9], 16
        $region60: #{tpu_custom_call.1} parent=27 // pred_fallthru
          _
      $region28: #{tpu_custom_call.1} parent=5 // pred_fallthru
        _
      %p2789 = scmp.le.s32.totalorder 2, %s19
      // Predicated region
      $region61: #{tpu_custom_call.1} parent=5 // pred_check
        %p2790 = pneg %p2789
      $region62: #{tpu_custom_call.1} parent=5 // pred_check_branch
        %2792 = sbr.rel (%p2790) target = $region64
      $region63: #{tpu_custom_call.1} parent=5 // pred_region
        %s2793 = ssub.s32 %s19, 2
        // Predicated region
        $region65: #{tpu_custom_call.1} parent=63 // pred_check
          %p2794 = pneg %p95
        $region66: #{tpu_custom_call.1} parent=63 // pred_check_branch
          %2796 = sbr.rel (%p2794) target = $region68
        $region67: #{tpu_custom_call.1} parent=63 // pred_region
          %s2797 = sand.u32 %s80, 1
          %s2798 = scalar_lea.sflag [#allocation4], %s2797
          %s2799 = sand.u32 %s80, 1
          %s2800 = smul.addr %s2799, 64
          %s2801 = scalar_lea.vmem [#allocation7], %s2800
          %2802 = dma.done %s2798, 1024
        $region68: #{tpu_custom_call.1} parent=63 // pred_fallthru
          _
      $region64: #{tpu_custom_call.1} parent=5 // pred_fallthru
        _
    $region6: #{tpu_custom_call.1} parent=1 // loop_footer
      %s23 = sadd.s32 1, %s19
    $region7: #{tpu_custom_call.1} parent=1 // loop_footer_branch
      %18 = sbr.rel target = $region3
    $region8: #{tpu_custom_call.1} parent=1 // loop_exit
      _
    %2803 = vsyncpa [#allocation3], 1
    %s2804 = scalar_lea.sflag [#allocation3], 1
    %2805 = vsyncpa %s2804, 1
    %2806 = vsyncpa [#allocation6], 1
    %2807 = vsyncpa [#allocation4], 1
    %s2808 = scalar_lea.sflag [#allocation4], 1
    %2809 = vsyncpa %s2808, 1
    %2810 = vsyncpa [#allocation9], 1

</llo_original>
